<compile_context>
chip_gen: v5e
topology: v5e:2x2
jax: 0.10.0
libtpu: 0.0.40
codegen_flags: <defaults>
</compile_context>

<pallas_src>
import functools

import jax
import jax.numpy as jnp
from jax.experimental import pallas as pl
from jax.experimental.pallas import tpu as pltpu


# ------------------------- fused conv (+pool) kernel -------------------------


def _conv_k3_kernel(x_ref, w_ref, b_ref, o_ref, *scratch, pool, l_in):
    """Conv1d(k=3, pad=1) + bias + ReLU (+ MaxPool1d(2)) on one batch tile.

    x_ref : (Bblk*l_in, Cin)   channel-last rows, batch elements stacked on M
    w_ref : (Cin, 3*Cout)      [w_tap0 | w_tap1 | w_tap2] concatenated on N
    b_ref : (1, Cout)
    o_ref : (Bblk*l_out, Cout) l_out = l_in // 2 if pool else l_in
    scratch: (Bblk*l_in, Cout) f32 staging tile, present only when pool=True
    """
    m_in = x_ref.shape[0]
    cout = o_ref.shape[-1]

    # One MXU matmul on the aligned input tile against all three tap weights.
    y = jnp.dot(x_ref[...], w_ref[...], preferred_element_type=jnp.float32)
    y_prev = y[:, 0:cout]            # tap applied to x[l-1]
    y_mid = y[:, cout:2 * cout]      # tap applied to x[l]
    y_next = y[:, 2 * cout:]         # tap applied to x[l+1]

    # Align the +-1 taps by shifting whole rows of the partial sums.  Rows that
    # would reach across a batch-element boundary (or wrap around the tile) are
    # exactly the conv's zero-padding positions, so mask them to zero.
    pos = jax.lax.broadcasted_iota(jnp.int32, (m_in, cout), 0) % l_in
    conv = y_mid
    conv = conv + jnp.where(pos == 0, 0.0, jnp.roll(y_prev, 1, axis=0))
    conv = conv + jnp.where(pos == l_in - 1, 0.0, jnp.roll(y_next, -1, axis=0))

    if pool:
        # Fused MaxPool1d(2): pair each row with its right neighbour, stage the
        # result in VMEM, and keep the even rows with one sublane-strided read.
        # Only even rows are consumed, so the pairing never crosses a batch
        # element (l_in is even).
        y_scr, = scratch
        y_scr[...] = jnp.maximum(conv, jnp.roll(conv, -1, axis=0))
        z = y_scr[pl.ds(0, m_in // 2, 2), :]
    else:
        z = conv

    # Bias + ReLU after the (monotone) max-pool: identical result, half the VPU
    # work on pooled layers.  Single aligned, lane-dense full-tile store.
    o_ref[...] = jnp.maximum(z + b_ref[...], 0.0).astype(o_ref.dtype)


def _pick_batch_tile(batch, l_in, l_out, row_target=512):
    """Largest batch tile whose input block stays near row_target rows while
    keeping every non-full block 8-sublane aligned."""
    cands = []
    for d in range(1, batch + 1):
        if batch % d:
            continue
        if d != batch and ((d * l_in) % 8 or (d * l_out) % 8):
            continue
        cands.append(d)
    under = [d for d in cands if d * l_in <= row_target]
    return max(under) if under else min(cands)


def conv1d_k3(x, w_cat, bias, *, batch, l_in, pool):
    """relu(conv1d_k3(x) + b) [+ maxpool2] on channel-last x of shape (B*l_in, Cin)."""
    cin = x.shape[-1]
    cout = bias.shape[-1]
    l_out = l_in // 2 if pool else l_in
    bblk = _pick_batch_tile(batch, l_in, l_out)
    m_in, m_out = bblk * l_in, bblk * l_out

    kernel = functools.partial(_conv_k3_kernel, pool=pool, l_in=l_in)
    scratch = [pltpu.VMEM((m_in, cout), jnp.float32)] if pool else []
    return pl.pallas_call(
        kernel,
        out_shape=jax.ShapeDtypeStruct((batch * l_out, cout), jnp.float32),
        grid=(batch // bblk,),
        in_specs=[
            pl.BlockSpec((m_in, cin), lambda i: (i, 0)),
            pl.BlockSpec((cin, 3 * cout), lambda i: (0, 0)),
            pl.BlockSpec((1, cout), lambda i: (0, 0)),
        ],
        out_specs=pl.BlockSpec((m_out, cout), lambda i: (i, 0)),
        scratch_shapes=scratch,
        compiler_params=pltpu.CompilerParams(
            dimension_semantics=("parallel",)),  # batch tiles shard over TCs
    )(x, w_cat, bias)


# ------------------------ fused fc1+ReLU+fc2 head kernel ---------------------


def _fc_head_kernel(x_ref, w1_ref, b1_ref, w2_ref, b2_ref, o_ref, acc_ref):
    """K-tiled fc1 (+ReLU) with fc2 fused into the final epilogue."""
    @pl.when(pl.program_id(0) == 0)
    def _():
        acc_ref[...] = jnp.zeros_like(acc_ref)

    acc_ref[...] += jnp.dot(x_ref[...], w1_ref[...],
                            preferred_element_type=jnp.float32)

    @pl.when(pl.program_id(0) == pl.num_programs(0) - 1)
    def _():
        h = jnp.maximum(acc_ref[...] + b1_ref[...], 0.0)
        # Dropout(0.5) is the identity at inference time.
        out = jnp.dot(h, w2_ref[...], preferred_element_type=jnp.float32)
        o_ref[...] = (out + b2_ref[...]).astype(o_ref.dtype)


def _pick_k_tile(m, k, n, vmem_budget_bytes=8 << 20):
    """Largest 128-multiple K tile whose double-buffered f32 blocks fit the budget."""
    cap = max(128, vmem_budget_bytes // (8 * (m + n)))
    if k <= cap:
        return k
    best = 128
    t = 256
    while t <= cap:
        if k % t == 0:
            best = t
        t += 128
    return best


def fc_head(x, w1, b1, w2, b2):
    """relu(x @ w1 + b1) @ w2 + b2 with a K-tiled f32 VMEM accumulator."""
    m, k = x.shape
    n_h = w1.shape[-1]
    n_o = w2.shape[-1]
    tk = _pick_k_tile(m, k, n_h)
    return pl.pallas_call(
        _fc_head_kernel,
        out_shape=jax.ShapeDtypeStruct((m, n_o), jnp.float32),
        grid=(k // tk,),
        in_specs=[
            pl.BlockSpec((m, tk), lambda ki: (0, ki)),
            pl.BlockSpec((tk, n_h), lambda ki: (ki, 0)),
            pl.BlockSpec((1, n_h), lambda ki: (0, 0)),
            pl.BlockSpec((n_h, n_o), lambda ki: (0, 0)),
            pl.BlockSpec((1, n_o), lambda ki: (0, 0)),
        ],
        out_specs=pl.BlockSpec((m, n_o), lambda ki: (0, 0)),
        scratch_shapes=[pltpu.VMEM((m, n_h), jnp.float32)],
        compiler_params=pltpu.CompilerParams(
            dimension_semantics=("arbitrary",)),  # K is a reduction axis
    )(x, w1, b1, w2, b2)


# ------------------------------ params & model -------------------------------


def init_params(key, seq_len, num_classes, in_channels):
    """Deterministic init; raw shapes follow the PyTorch module."""
    ks = jax.random.split(key, 10)

    def u(k, shape, fan_in):
        bound = 1.0 / jnp.sqrt(float(fan_in))
        return jax.random.uniform(k, shape, jnp.float32, -bound, bound)

    p = {}
    p["w1"] = u(ks[0], (64, in_channels, 3), in_channels * 3)
    p["b1"] = u(ks[1], (64,), in_channels * 3)
    p["w2"] = u(ks[2], (128, 64, 3), 64 * 3)
    p["b2"] = u(ks[3], (128,), 64 * 3)
    p["w3"] = u(ks[4], (128, 128, 3), 128 * 3)
    p["b3"] = u(ks[5], (128,), 128 * 3)
    fc1_in = 128 * (seq_len // 4)
    p["wf1"] = u(ks[6], (128, fc1_in), fc1_in)   # PyTorch Linear: (out, in)
    p["bf1"] = u(ks[7], (128,), fc1_in)
    p["wf2"] = u(ks[8], (num_classes, 128), 128)
    p["bf2"] = u(ks[9], (num_classes,), 128)
    return p


def prep_params(p, seq_len):
    """One-time weight layout prep, hoisted out of the forward pass."""
    l4 = seq_len // 4

    def conv_w(w, b, cin_pad=None, cout_pad=None):
        cout, cin, _ = w.shape
        cin_p = cin if cin_pad is None else cin_pad
        cout_p = cout if cout_pad is None else cout_pad
        taps = [jnp.pad(jnp.transpose(w[:, :, t], (1, 0)),
                        ((0, cin_p - cin), (0, cout_p - cout)))
                for t in range(3)]
        return (jnp.concatenate(taps, axis=1),                  # (cin_p, 3*cout_p)
                jnp.pad(b, (0, cout_p - cout)).reshape(1, cout_p))

    q = {}
    # conv1: pad Cout 64 -> 128 so every conv activation tile is lane-dense.
    q["c1_w"], q["c1_b"] = conv_w(p["w1"], p["b1"], cout_pad=128)
    # conv2: pad Cin 64 -> 128 (the padded conv1 channels are identically zero).
    q["c2_w"], q["c2_b"] = conv_w(p["w2"], p["b2"], cin_pad=128)
    q["c3_w"], q["c3_b"] = conv_w(p["w3"], p["b3"])
    # fc1: PyTorch flattens the (B, C, L) conv3 output channel-major (c*L4 + l);
    # our activations flatten position-major (l*128 + c).  Permute wf1's input
    # axis once here so the forward pass needs no activation transpose.
    wf1 = p["wf1"].reshape(128, 128, l4)           # (out, c, l)
    q["f1_w"] = jnp.transpose(wf1, (2, 1, 0)).reshape(l4 * 128, 128)
    q["f1_b"] = p["bf1"].reshape(1, 128)
    # fc2: pad N (num_classes) -> 128 so the fused epilogue store is lane-dense;
    # the (B, num_classes) slice happens outside the kernel.
    nc = p["wf2"].shape[0]
    assert nc <= 128
    q["f2_w"] = jnp.pad(jnp.transpose(p["wf2"], (1, 0)), ((0, 0), (0, 128 - nc)))
    q["f2_b"] = jnp.pad(p["bf2"], (0, 128 - nc)).reshape(1, 128)
    return q


def cnn1d_forward(params, x_ncl, *, num_classes):
    """x_ncl: (B, in_channels, seq_len), PyTorch layout -> (B, num_classes)."""
    batch, _, seq_len = x_ncl.shape
    assert seq_len % 4 == 0, "two MaxPool1d(2) layers require seq_len % 4 == 0"
    # Channel-last, (batch, position) flattened onto the matmul M axis.
    x = jnp.transpose(x_ncl, (0, 2, 1)).reshape(batch * seq_len, -1)
    x = conv1d_k3(x, params["c1_w"], params["c1_b"],
                  batch=batch, l_in=seq_len, pool=True)
    x = conv1d_k3(x, params["c2_w"], params["c2_b"],
                  batch=batch, l_in=seq_len // 2, pool=True)
    x = conv1d_k3(x, params["c3_w"], params["c3_b"],
                  batch=batch, l_in=seq_len // 4, pool=False)
    # (B*L4, 128) -> (B, L4*128): row-major compatible, so this reshape is free.
    x = x.reshape(batch, -1)
    x = fc_head(x, params["f1_w"], params["f1_b"],
                params["f2_w"], params["f2_b"])
    return x[:, :num_classes]


# --------------------------------- reference ---------------------------------


def _reference_forward(p, x_ncl):
    """Pure-XLA reference mirroring the PyTorch module (sanity check only)."""
    hp = jax.lax.Precision.HIGHEST

    def conv(x, w, b):                 # x: (B, Cin, L), w: (Cout, Cin, 3)
        length = x.shape[-1]
        xp = jnp.pad(x, ((0, 0), (0, 0), (1, 1)))
        y = sum(jnp.einsum("bcl,oc->bol", xp[:, :, k:k + length], w[:, :, k],
                           precision=hp) for k in range(3))
        return y + b[None, :, None]

    x = jax.nn.relu(conv(x_ncl, p["w1"], p["b1"]))
    x = jnp.maximum(x[:, :, 0::2], x[:, :, 1::2])
    x = jax.nn.relu(conv(x, p["w2"], p["b2"]))
    x = jnp.maximum(x[:, :, 0::2], x[:, :, 1::2])
    x = jax.nn.relu(conv(x, p["w3"], p["b3"]))
    x = x.reshape(x.shape[0], -1)
    x = jax.nn.relu(jnp.dot(x, p["wf1"].T, precision=hp) + p["bf1"])
    return jnp.dot(x, p["wf2"].T, precision=hp) + p["bf2"]


if __name__ == "__main__":
    B, in_channels, seq_len, num_classes = 2, 4, 16, 5
    key = jax.random.PRNGKey(0)
    k_x, k_p = jax.random.split(key)
    x = jax.random.normal(k_x, (B, in_channels, seq_len), jnp.float32)

    raw = init_params(k_p, seq_len, num_classes, in_channels)
    params = prep_params(raw, seq_len)              # one-time layout prep

    fwd = jax.jit(functools.partial(cnn1d_forward, num_classes=num_classes))
    out = jax.block_until_ready(fwd(params, x))
    assert out.shape == (B, num_classes), out.shape
    assert out.dtype == jnp.float32

    ref = _reference_forward(raw, x)
    max_err = float(jnp.max(jnp.abs(out - ref)))
    assert jnp.allclose(out, ref, rtol=1e-4, atol=1e-4), max_err
    print("KERNEL_OK")
</pallas_src>

<mosaic_0001>
module attributes {stable_mosaic.version = 11 : i64} {
  func.func @_conv_k3_kernel(%arg0: i32, %arg1: memref<8x128xf32, #tpu.memory_space<vmem>>, %arg2: memref<128x384xf32, #tpu.memory_space<vmem>>, %arg3: memref<1x128xf32, #tpu.memory_space<vmem>>, %arg4: memref<8x128xf32, #tpu.memory_space<vmem>>) attributes {dimension_semantics = [#tpu.dimension_semantics<parallel>], iteration_bounds = array<i64: 1>, scalar_prefetch = 0 : i64, scratch_operands = 0 : i64, tpu.core_type = #tpu.core_type<tc>, window_params = [{transform_indices = @transform_0, window_bounds = array<i64: 8, 128>}, {pipeline_mode = #tpu.pipeline_mode<synchronous>, transform_indices = @transform_1, window_bounds = array<i64: 128, 384>}, {pipeline_mode = #tpu.pipeline_mode<synchronous>, transform_indices = @transform_2, window_bounds = array<i64: 1, 128>}, {transform_indices = @transform_3, window_bounds = array<i64: 8, 128>}]} {
    %c0 = arith.constant 0 : index
    %c0_0 = arith.constant 0 : index
    %0 = vector.load %arg1[%c0, %c0_0] : memref<8x128xf32, #tpu.memory_space<vmem>>, vector<8x128xf32>
    %c0_1 = arith.constant 0 : index
    %c0_2 = arith.constant 0 : index
    %1 = vector.load %arg2[%c0_1, %c0_2] : memref<128x384xf32, #tpu.memory_space<vmem>>, vector<128x384xf32>
    %cst = arith.constant dense<0.000000e+00> : vector<8x384xf32>
    %2 = tpu.matmul %0, %1, %cst {dimension_numbers = #tpu.dot_dimension_numbers<[1], [0], [0], [1], [0, 0, 1, 1], [], []>} : vector<8x128xf32>, vector<128x384xf32>, vector<8x384xf32> -> vector<8x384xf32>
    %3 = vector.extract_strided_slice %2 {offsets = [0, 0], sizes = [8, 128], strides = [1, 1]} : vector<8x384xf32> to vector<8x128xf32>
    %4 = vector.extract_strided_slice %2 {offsets = [0, 128], sizes = [8, 128], strides = [1, 1]} : vector<8x384xf32> to vector<8x128xf32>
    %5 = vector.extract_strided_slice %2 {offsets = [0, 256], sizes = [8, 128], strides = [1, 1]} : vector<8x384xf32> to vector<8x128xf32>
    %6 = tpu.iota {dimensions = array<i32: 0>} : vector<8x128xi32>
    %c4_i32 = arith.constant 4 : i32
    %c0_i32 = arith.constant 0 : i32
    %7 = arith.cmpi eq, %c4_i32, %c0_i32 : i32
    %c1_i32 = arith.constant 1 : i32
    %8 = arith.select %7, %c1_i32, %c4_i32 : i32
    %9 = vector.broadcast %8 : i32 to vector<8x128xi32>
    %10 = arith.remsi %6, %9 : vector<8x128xi32>
    %c0_i32_3 = arith.constant 0 : i32
    %11 = vector.broadcast %c0_i32_3 : i32 to vector<8x128xi32>
    %12 = arith.cmpi ne, %10, %11 : vector<8x128xi32>
    %c0_i32_4 = arith.constant 0 : i32
    %13 = vector.broadcast %c0_i32_4 : i32 to vector<8x128xi32>
    %14 = arith.cmpi slt, %10, %13 : vector<8x128xi32>
    %c0_i32_5 = arith.constant 0 : i32
    %15 = arith.cmpi slt, %8, %c0_i32_5 : i32
    %16 = vector.broadcast %15 : i1 to vector<8x128xi1>
    %17 = vector.broadcast %16 : vector<8x128xi1> to vector<8x128xi1>
    %18 = arith.xori %14, %17 : vector<8x128xi1>
    %19 = arith.andi %18, %12 : vector<8x128xi1>
    %20 = vector.broadcast %8 : i32 to vector<8x128xi32>
    %21 = arith.addi %10, %20 : vector<8x128xi32>
    %22 = arith.select %19, %21, %10 : vector<8x128xi1>, vector<8x128xi32>
    %c0_i32_6 = arith.constant 0 : i32
    %23 = vector.broadcast %c0_i32_6 : i32 to vector<8x128xi32>
    %24 = arith.cmpi eq, %22, %23 : vector<8x128xi32>
    %25 = vector.extract_strided_slice %3 {offsets = [7, 0], sizes = [1, 128], strides = [1, 1]} : vector<8x128xf32> to vector<1x128xf32>
    %26 = vector.extract_strided_slice %3 {offsets = [0, 0], sizes = [7, 128], strides = [1, 1]} : vector<8x128xf32> to vector<7x128xf32>
    %27 = tpu.concatenate %25, %26 in 0 : vector<1x128xf32>, vector<7x128xf32> -> vector<8x128xf32>
    %cst_7 = arith.constant 0.000000e+00 : f32
    %28 = vector.broadcast %cst_7 : f32 to vector<8x128xf32>
    %29 = arith.select %24, %28, %27 : vector<8x128xi1>, vector<8x128xf32>
    %30 = arith.addf %4, %29 : vector<8x128xf32>
    %c3_i32 = arith.constant 3 : i32
    %31 = vector.broadcast %c3_i32 : i32 to vector<8x128xi32>
    %32 = arith.cmpi eq, %22, %31 : vector<8x128xi32>
    %33 = vector.extract_strided_slice %5 {offsets = [1, 0], sizes = [7, 128], strides = [1, 1]} : vector<8x128xf32> to vector<7x128xf32>
    %34 = vector.extract_strided_slice %5 {offsets = [0, 0], sizes = [1, 128], strides = [1, 1]} : vector<8x128xf32> to vector<1x128xf32>
    %35 = tpu.concatenate %33, %34 in 0 : vector<7x128xf32>, vector<1x128xf32> -> vector<8x128xf32>
    %cst_8 = arith.constant 0.000000e+00 : f32
    %36 = vector.broadcast %cst_8 : f32 to vector<8x128xf32>
    %37 = arith.select %32, %36, %35 : vector<8x128xi1>, vector<8x128xf32>
    %38 = arith.addf %30, %37 : vector<8x128xf32>
    %c0_9 = arith.constant 0 : index
    %c0_10 = arith.constant 0 : index
    %39 = vector.load %arg3[%c0_9, %c0_10] : memref<1x128xf32, #tpu.memory_space<vmem>>, vector<1x128xf32>
    %40 = vector.broadcast %39 : vector<1x128xf32> to vector<8x128xf32>
    %41 = arith.addf %38, %40 : vector<8x128xf32>
    %cst_11 = arith.constant 0.000000e+00 : f32
    %42 = vector.broadcast %cst_11 : f32 to vector<8x128xf32>
    %43 = arith.maximumf %41, %42 : vector<8x128xf32>
    %c0_12 = arith.constant 0 : index
    %c0_13 = arith.constant 0 : index
    %44 = vector.load %arg4[%c0_12, %c0_13] : memref<8x128xf32, #tpu.memory_space<vmem>>, vector<8x128xf32>
    tpu.vector_store %arg4[%c0_12, %c0_13], %43 {strides = array<i32>} : memref<8x128xf32, #tpu.memory_space<vmem>>, vector<8x128xf32>,
    return
  }
  func.func @transform_0(%arg0: i32) -> (i32, i32) {
    %c0_i32 = arith.constant 0 : i32
    %c0_i32_0 = arith.constant 0 : i32
    return %arg0, %c0_i32 : i32, i32
  }
  func.func @transform_1(%arg0: i32) -> (i32, i32) {
    %c0_i32 = arith.constant 0 : i32
    %c0_i32_0 = arith.constant 0 : i32
    %c0_i32_1 = arith.constant 0 : i32
    return %c0_i32, %c0_i32_0 : i32, i32
  }
  func.func @transform_2(%arg0: i32) -> (i32, i32) {
    %c0_i32 = arith.constant 0 : i32
    %c0_i32_0 = arith.constant 0 : i32
    %c0_i32_1 = arith.constant 0 : i32
    return %c0_i32, %c0_i32_0 : i32, i32
  }
  func.func @transform_3(%arg0: i32) -> (i32, i32) {
    %c0_i32 = arith.constant 0 : i32
    %c0_i32_0 = arith.constant 0 : i32
    return %arg0, %c0_i32 : i32, i32
  }
}

module attributes {stable_mosaic.version = 11 : i64} {
  func.func @_conv_k3_kernel(%arg0: i32, %arg1: memref<16x128xf32, #tpu.memory_space<vmem>>, %arg2: memref<128x384xf32, #tpu.memory_space<vmem>>, %arg3: memref<1x128xf32, #tpu.memory_space<vmem>>, %arg4: memref<8x128xf32, #tpu.memory_space<vmem>>, %arg5: memref<16x128xf32, #tpu.memory_space<vmem>>) attributes {dimension_semantics = [#tpu.dimension_semantics<parallel>], iteration_bounds = array<i64: 1>, scalar_prefetch = 0 : i64, scratch_operands = 1 : i64, tpu.core_type = #tpu.core_type<tc>, window_params = [{transform_indices = @transform_0, window_bounds = array<i64: 16, 128>}, {pipeline_mode = #tpu.pipeline_mode<synchronous>, transform_indices = @transform_1, window_bounds = array<i64: 128, 384>}, {pipeline_mode = #tpu.pipeline_mode<synchronous>, transform_indices = @transform_2, window_bounds = array<i64: 1, 128>}, {transform_indices = @transform_3, window_bounds = array<i64: 8, 128>}]} {
    %c0 = arith.constant 0 : index
    %c0_0 = arith.constant 0 : index
    %0 = vector.load %arg1[%c0, %c0_0] : memref<16x128xf32, #tpu.memory_space<vmem>>, vector<16x128xf32>
    %c0_1 = arith.constant 0 : index
    %c0_2 = arith.constant 0 : index
    %1 = vector.load %arg2[%c0_1, %c0_2] : memref<128x384xf32, #tpu.memory_space<vmem>>, vector<128x384xf32>
    %cst = arith.constant dense<0.000000e+00> : vector<16x384xf32>
    %2 = tpu.matmul %0, %1, %cst {dimension_numbers = #tpu.dot_dimension_numbers<[1], [0], [0], [1], [0, 0, 1, 1], [], []>} : vector<16x128xf32>, vector<128x384xf32>, vector<16x384xf32> -> vector<16x384xf32>
    %3 = vector.extract_strided_slice %2 {offsets = [0, 0], sizes = [16, 128], strides = [1, 1]} : vector<16x384xf32> to vector<16x128xf32>
    %4 = vector.extract_strided_slice %2 {offsets = [0, 128], sizes = [16, 128], strides = [1, 1]} : vector<16x384xf32> to vector<16x128xf32>
    %5 = vector.extract_strided_slice %2 {offsets = [0, 256], sizes = [16, 128], strides = [1, 1]} : vector<16x384xf32> to vector<16x128xf32>
    %6 = tpu.iota {dimensions = array<i32: 0>} : vector<16x128xi32>
    %c8_i32 = arith.constant 8 : i32
    %c0_i32 = arith.constant 0 : i32
    %7 = arith.cmpi eq, %c8_i32, %c0_i32 : i32
    %c1_i32 = arith.constant 1 : i32
    %8 = arith.select %7, %c1_i32, %c8_i32 : i32
    %9 = vector.broadcast %8 : i32 to vector<16x128xi32>
    %10 = arith.remsi %6, %9 : vector<16x128xi32>
    %c0_i32_3 = arith.constant 0 : i32
    %11 = vector.broadcast %c0_i32_3 : i32 to vector<16x128xi32>
    %12 = arith.cmpi ne, %10, %11 : vector<16x128xi32>
    %c0_i32_4 = arith.constant 0 : i32
    %13 = vector.broadcast %c0_i32_4 : i32 to vector<16x128xi32>
    %14 = arith.cmpi slt, %10, %13 : vector<16x128xi32>
    %c0_i32_5 = arith.constant 0 : i32
    %15 = arith.cmpi slt, %8, %c0_i32_5 : i32
    %16 = vector.broadcast %15 : i1 to vector<16x128xi1>
    %17 = vector.broadcast %16 : vector<16x128xi1> to vector<16x128xi1>
    %18 = arith.xori %14, %17 : vector<16x128xi1>
    %19 = arith.andi %18, %12 : vector<16x128xi1>
    %20 = vector.broadcast %8 : i32 to vector<16x128xi32>
    %21 = arith.addi %10, %20 : vector<16x128xi32>
    %22 = arith.select %19, %21, %10 : vector<16x128xi1>, vector<16x128xi32>
    %c0_i32_6 = arith.constant 0 : i32
    %23 = vector.broadcast %c0_i32_6 : i32 to vector<16x128xi32>
    %24 = arith.cmpi eq, %22, %23 : vector<16x128xi32>
    %25 = vector.extract_strided_slice %3 {offsets = [15, 0], sizes = [1, 128], strides = [1, 1]} : vector<16x128xf32> to vector<1x128xf32>
    %26 = vector.extract_strided_slice %3 {offsets = [0, 0], sizes = [15, 128], strides = [1, 1]} : vector<16x128xf32> to vector<15x128xf32>
    %27 = tpu.concatenate %25, %26 in 0 : vector<1x128xf32>, vector<15x128xf32> -> vector<16x128xf32>
    %cst_7 = arith.constant 0.000000e+00 : f32
    %28 = vector.broadcast %cst_7 : f32 to vector<16x128xf32>
    %29 = arith.select %24, %28, %27 : vector<16x128xi1>, vector<16x128xf32>
    %30 = arith.addf %4, %29 : vector<16x128xf32>
    %c7_i32 = arith.constant 7 : i32
    %31 = vector.broadcast %c7_i32 : i32 to vector<16x128xi32>
    %32 = arith.cmpi eq, %22, %31 : vector<16x128xi32>
    %33 = vector.extract_strided_slice %5 {offsets = [1, 0], sizes = [15, 128], strides = [1, 1]} : vector<16x128xf32> to vector<15x128xf32>
    %34 = vector.extract_strided_slice %5 {offsets = [0, 0], sizes = [1, 128], strides = [1, 1]} : vector<16x128xf32> to vector<1x128xf32>
    %35 = tpu.concatenate %33, %34 in 0 : vector<15x128xf32>, vector<1x128xf32> -> vector<16x128xf32>
    %cst_8 = arith.constant 0.000000e+00 : f32
    %36 = vector.broadcast %cst_8 : f32 to vector<16x128xf32>
    %37 = arith.select %32, %36, %35 : vector<16x128xi1>, vector<16x128xf32>
    %38 = arith.addf %30, %37 : vector<16x128xf32>
    %39 = vector.extract_strided_slice %38 {offsets = [1, 0], sizes = [15, 128], strides = [1, 1]} : vector<16x128xf32> to vector<15x128xf32>
    %40 = vector.extract_strided_slice %38 {offsets = [0, 0], sizes = [1, 128], strides = [1, 1]} : vector<16x128xf32> to vector<1x128xf32>
    %41 = tpu.concatenate %39, %40 in 0 : vector<15x128xf32>, vector<1x128xf32> -> vector<16x128xf32>
    %42 = arith.maximumf %38, %41 : vector<16x128xf32>
    %c0_9 = arith.constant 0 : index
    %c0_10 = arith.constant 0 : index
    %43 = vector.load %arg5[%c0_9, %c0_10] : memref<16x128xf32, #tpu.memory_space<vmem>>, vector<16x128xf32>
    tpu.vector_store %arg5[%c0_9, %c0_10], %42 {strides = array<i32>} : memref<16x128xf32, #tpu.memory_space<vmem>>, vector<16x128xf32>,
    %c0_11 = arith.constant 0 : index
    %c0_12 = arith.constant 0 : index
    %44 = tpu.strided_load %arg5[%c0_11, %c0_12] {strides = array<i32: 2, 1>} : memref<16x128xf32, #tpu.memory_space<vmem>>, vector<8x128xf32>
    %c0_13 = arith.constant 0 : index
    %c0_14 = arith.constant 0 : index
    %45 = vector.load %arg3[%c0_13, %c0_14] : memref<1x128xf32, #tpu.memory_space<vmem>>, vector<1x128xf32>
    %46 = vector.broadcast %45 : vector<1x128xf32> to vector<8x128xf32>
    %47 = arith.addf %44, %46 : vector<8x128xf32>
    %cst_15 = arith.constant 0.000000e+00 : f32
    %48 = vector.broadcast %cst_15 : f32 to vector<8x128xf32>
    %49 = arith.maximumf %47, %48 : vector<8x128xf32>
    %c0_16 = arith.constant 0 : index
    %c0_17 = arith.constant 0 : index
    %50 = vector.load %arg4[%c0_16, %c0_17] : memref<8x128xf32, #tpu.memory_space<vmem>>, vector<8x128xf32>
    tpu.vector_store %arg4[%c0_16, %c0_17], %49 {strides = array<i32>} : memref<8x128xf32, #tpu.memory_space<vmem>>, vector<8x128xf32>,
    return
  }
  func.func @transform_0(%arg0: i32) -> (i32, i32) {
    %c0_i32 = arith.constant 0 : i32
    %c0_i32_0 = arith.constant 0 : i32
    return %arg0, %c0_i32 : i32, i32
  }
  func.func @transform_1(%arg0: i32) -> (i32, i32) {
    %c0_i32 = arith.constant 0 : i32
    %c0_i32_0 = arith.constant 0 : i32
    %c0_i32_1 = arith.constant 0 : i32
    return %c0_i32, %c0_i32_0 : i32, i32
  }
  func.func @transform_2(%arg0: i32) -> (i32, i32) {
    %c0_i32 = arith.constant 0 : i32
    %c0_i32_0 = arith.constant 0 : i32
    %c0_i32_1 = arith.constant 0 : i32
    return %c0_i32, %c0_i32_0 : i32, i32
  }
  func.func @transform_3(%arg0: i32) -> (i32, i32) {
    %c0_i32 = arith.constant 0 : i32
    %c0_i32_0 = arith.constant 0 : i32
    return %arg0, %c0_i32 : i32, i32
  }
}

module attributes {stable_mosaic.version = 11 : i64} {
  func.func @_conv_k3_kernel(%arg0: i32, %arg1: memref<32x4xf32, #tpu.memory_space<vmem>>, %arg2: memref<4x384xf32, #tpu.memory_space<vmem>>, %arg3: memref<1x128xf32, #tpu.memory_space<vmem>>, %arg4: memref<16x128xf32, #tpu.memory_space<vmem>>, %arg5: memref<32x128xf32, #tpu.memory_space<vmem>>) attributes {dimension_semantics = [#tpu.dimension_semantics<parallel>], iteration_bounds = array<i64: 1>, scalar_prefetch = 0 : i64, scratch_operands = 1 : i64, tpu.core_type = #tpu.core_type<tc>, window_params = [{transform_indices = @transform_0, window_bounds = array<i64: 32, 4>}, {pipeline_mode = #tpu.pipeline_mode<synchronous>, transform_indices = @transform_1, window_bounds = array<i64: 4, 384>}, {pipeline_mode = #tpu.pipeline_mode<synchronous>, transform_indices = @transform_2, window_bounds = array<i64: 1, 128>}, {transform_indices = @transform_3, window_bounds = array<i64: 16, 128>}]} {
    %c0 = arith.constant 0 : index
    %c0_0 = arith.constant 0 : index
    %0 = vector.load %arg1[%c0, %c0_0] : memref<32x4xf32, #tpu.memory_space<vmem>>, vector<32x4xf32>
    %c0_1 = arith.constant 0 : index
    %c0_2 = arith.constant 0 : index
    %1 = vector.load %arg2[%c0_1, %c0_2] : memref<4x384xf32, #tpu.memory_space<vmem>>, vector<4x384xf32>
    %cst = arith.constant dense<0.000000e+00> : vector<32x384xf32>
    %2 = tpu.matmul %0, %1, %cst {dimension_numbers = #tpu.dot_dimension_numbers<[1], [0], [0], [1], [0, 0, 1, 1], [], []>} : vector<32x4xf32>, vector<4x384xf32>, vector<32x384xf32> -> vector<32x384xf32>
    %3 = vector.extract_strided_slice %2 {offsets = [0, 0], sizes = [32, 128], strides = [1, 1]} : vector<32x384xf32> to vector<32x128xf32>
    %4 = vector.extract_strided_slice %2 {offsets = [0, 128], sizes = [32, 128], strides = [1, 1]} : vector<32x384xf32> to vector<32x128xf32>
    %5 = vector.extract_strided_slice %2 {offsets = [0, 256], sizes = [32, 128], strides = [1, 1]} : vector<32x384xf32> to vector<32x128xf32>
    %6 = tpu.iota {dimensions = array<i32: 0>} : vector<32x128xi32>
    %c16_i32 = arith.constant 16 : i32
    %c0_i32 = arith.constant 0 : i32
    %7 = arith.cmpi eq, %c16_i32, %c0_i32 : i32
    %c1_i32 = arith.constant 1 : i32
    %8 = arith.select %7, %c1_i32, %c16_i32 : i32
    %9 = vector.broadcast %8 : i32 to vector<32x128xi32>
    %10 = arith.remsi %6, %9 : vector<32x128xi32>
    %c0_i32_3 = arith.constant 0 : i32
    %11 = vector.broadcast %c0_i32_3 : i32 to vector<32x128xi32>
    %12 = arith.cmpi ne, %10, %11 : vector<32x128xi32>
    %c0_i32_4 = arith.constant 0 : i32
    %13 = vector.broadcast %c0_i32_4 : i32 to vector<32x128xi32>
    %14 = arith.cmpi slt, %10, %13 : vector<32x128xi32>
    %c0_i32_5 = arith.constant 0 : i32
    %15 = arith.cmpi slt, %8, %c0_i32_5 : i32
    %16 = vector.broadcast %15 : i1 to vector<32x128xi1>
    %17 = vector.broadcast %16 : vector<32x128xi1> to vector<32x128xi1>
    %18 = arith.xori %14, %17 : vector<32x128xi1>
    %19 = arith.andi %18, %12 : vector<32x128xi1>
    %20 = vector.broadcast %8 : i32 to vector<32x128xi32>
    %21 = arith.addi %10, %20 : vector<32x128xi32>
    %22 = arith.select %19, %21, %10 : vector<32x128xi1>, vector<32x128xi32>
    %c0_i32_6 = arith.constant 0 : i32
    %23 = vector.broadcast %c0_i32_6 : i32 to vector<32x128xi32>
    %24 = arith.cmpi eq, %22, %23 : vector<32x128xi32>
    %25 = vector.extract_strided_slice %3 {offsets = [31, 0], sizes = [1, 128], strides = [1, 1]} : vector<32x128xf32> to vector<1x128xf32>
    %26 = vector.extract_strided_slice %3 {offsets = [0, 0], sizes = [31, 128], strides = [1, 1]} : vector<32x128xf32> to vector<31x128xf32>
    %27 = tpu.concatenate %25, %26 in 0 : vector<1x128xf32>, vector<31x128xf32> -> vector<32x128xf32>
    %cst_7 = arith.constant 0.000000e+00 : f32
    %28 = vector.broadcast %cst_7 : f32 to vector<32x128xf32>
    %29 = arith.select %24, %28, %27 : vector<32x128xi1>, vector<32x128xf32>
    %30 = arith.addf %4, %29 : vector<32x128xf32>
    %c15_i32 = arith.constant 15 : i32
    %31 = vector.broadcast %c15_i32 : i32 to vector<32x128xi32>
    %32 = arith.cmpi eq, %22, %31 : vector<32x128xi32>
    %33 = vector.extract_strided_slice %5 {offsets = [1, 0], sizes = [31, 128], strides = [1, 1]} : vector<32x128xf32> to vector<31x128xf32>
    %34 = vector.extract_strided_slice %5 {offsets = [0, 0], sizes = [1, 128], strides = [1, 1]} : vector<32x128xf32> to vector<1x128xf32>
    %35 = tpu.concatenate %33, %34 in 0 : vector<31x128xf32>, vector<1x128xf32> -> vector<32x128xf32>
    %cst_8 = arith.constant 0.000000e+00 : f32
    %36 = vector.broadcast %cst_8 : f32 to vector<32x128xf32>
    %37 = arith.select %32, %36, %35 : vector<32x128xi1>, vector<32x128xf32>
    %38 = arith.addf %30, %37 : vector<32x128xf32>
    %39 = vector.extract_strided_slice %38 {offsets = [1, 0], sizes = [31, 128], strides = [1, 1]} : vector<32x128xf32> to vector<31x128xf32>
    %40 = vector.extract_strided_slice %38 {offsets = [0, 0], sizes = [1, 128], strides = [1, 1]} : vector<32x128xf32> to vector<1x128xf32>
    %41 = tpu.concatenate %39, %40 in 0 : vector<31x128xf32>, vector<1x128xf32> -> vector<32x128xf32>
    %42 = arith.maximumf %38, %41 : vector<32x128xf32>
    %c0_9 = arith.constant 0 : index
    %c0_10 = arith.constant 0 : index
    %43 = vector.load %arg5[%c0_9, %c0_10] : memref<32x128xf32, #tpu.memory_space<vmem>>, vector<32x128xf32>
    tpu.vector_store %arg5[%c0_9, %c0_10], %42 {strides = array<i32>} : memref<32x128xf32, #tpu.memory_space<vmem>>, vector<32x128xf32>,
    %c0_11 = arith.constant 0 : index
    %c0_12 = arith.constant 0 : index
    %44 = tpu.strided_load %arg5[%c0_11, %c0_12] {strides = array<i32: 2, 1>} : memref<32x128xf32, #tpu.memory_space<vmem>>, vector<16x128xf32>
    %c0_13 = arith.constant 0 : index
    %c0_14 = arith.constant 0 : index
    %45 = vector.load %arg3[%c0_13, %c0_14] : memref<1x128xf32, #tpu.memory_space<vmem>>, vector<1x128xf32>
    %46 = vector.broadcast %45 : vector<1x128xf32> to vector<16x128xf32>
    %47 = arith.addf %44, %46 : vector<16x128xf32>
    %cst_15 = arith.constant 0.000000e+00 : f32
    %48 = vector.broadcast %cst_15 : f32 to vector<16x128xf32>
    %49 = arith.maximumf %47, %48 : vector<16x128xf32>
    %c0_16 = arith.constant 0 : index
    %c0_17 = arith.constant 0 : index
    %50 = vector.load %arg4[%c0_16, %c0_17] : memref<16x128xf32, #tpu.memory_space<vmem>>, vector<16x128xf32>
    tpu.vector_store %arg4[%c0_16, %c0_17], %49 {strides = array<i32>} : memref<16x128xf32, #tpu.memory_space<vmem>>, vector<16x128xf32>,
    return
  }
  func.func @transform_0(%arg0: i32) -> (i32, i32) {
    %c0_i32 = arith.constant 0 : i32
    %c0_i32_0 = arith.constant 0 : i32
    return %arg0, %c0_i32 : i32, i32
  }
  func.func @transform_1(%arg0: i32) -> (i32, i32) {
    %c0_i32 = arith.constant 0 : i32
    %c0_i32_0 = arith.constant 0 : i32
    %c0_i32_1 = arith.constant 0 : i32
    return %c0_i32, %c0_i32_0 : i32, i32
  }
  func.func @transform_2(%arg0: i32) -> (i32, i32) {
    %c0_i32 = arith.constant 0 : i32
    %c0_i32_0 = arith.constant 0 : i32
    %c0_i32_1 = arith.constant 0 : i32
    return %c0_i32, %c0_i32_0 : i32, i32
  }
  func.func @transform_3(%arg0: i32) -> (i32, i32) {
    %c0_i32 = arith.constant 0 : i32
    %c0_i32_0 = arith.constant 0 : i32
    return %arg0, %c0_i32 : i32, i32
  }
}

module attributes {stable_mosaic.version = 11 : i64} {
  func.func @_fc_head_kernel(%arg0: i32, %arg1: memref<2x512xf32, #tpu.memory_space<vmem>>, %arg2: memref<512x128xf32, #tpu.memory_space<vmem>>, %arg3: memref<1x128xf32, #tpu.memory_space<vmem>>, %arg4: memref<128x128xf32, #tpu.memory_space<vmem>>, %arg5: memref<1x128xf32, #tpu.memory_space<vmem>>, %arg6: memref<2x128xf32, #tpu.memory_space<vmem>>, %arg7: memref<2x128xf32, #tpu.memory_space<vmem>>) attributes {dimension_semantics = [#tpu.dimension_semantics<arbitrary>], iteration_bounds = array<i64: 1>, scalar_prefetch = 0 : i64, scratch_operands = 1 : i64, tpu.core_type = #tpu.core_type<tc>, window_params = [{transform_indices = @transform_0, window_bounds = array<i64: 2, 512>}, {transform_indices = @transform_1, window_bounds = array<i64: 512, 128>}, {pipeline_mode = #tpu.pipeline_mode<synchronous>, transform_indices = @transform_2, window_bounds = array<i64: 1, 128>}, {pipeline_mode = #tpu.pipeline_mode<synchronous>, transform_indices = @transform_3, window_bounds = array<i64: 128, 128>}, {pipeline_mode = #tpu.pipeline_mode<synchronous>, transform_indices = @transform_4, window_bounds = array<i64: 1, 128>}, {pipeline_mode = #tpu.pipeline_mode<synchronous>, transform_indices = @transform_5, window_bounds = array<i64: 2, 128>}]} {
    %c0_i32 = arith.constant 0 : i32
    %0 = arith.cmpi eq, %arg0, %c0_i32 : i32
    %1 = arith.extui %0 : i1 to i32
    %c0_i32_0 = arith.constant 0 : i32
    %2 = arith.cmpi ne, %1, %c0_i32_0 : i32
    scf.if %2 {
      %cst_10 = arith.constant 0.000000e+00 : f32
      %12 = vector.broadcast %cst_10 : f32 to vector<2x128xf32>
      %c0_11 = arith.constant 0 : index
      %c0_12 = arith.constant 0 : index
      %13 = vector.load %arg7[%c0_11, %c0_12] : memref<2x128xf32, #tpu.memory_space<vmem>>, vector<2x128xf32>
      tpu.vector_store %arg7[%c0_11, %c0_12], %12 {strides = array<i32>} : memref<2x128xf32, #tpu.memory_space<vmem>>, vector<2x128xf32>,
    } else {
    }
    %c0 = arith.constant 0 : index
    %c0_1 = arith.constant 0 : index
    %3 = vector.load %arg7[%c0, %c0_1] : memref<2x128xf32, #tpu.memory_space<vmem>>, vector<2x128xf32>
    %c0_2 = arith.constant 0 : index
    %c0_3 = arith.constant 0 : index
    %4 = vector.load %arg1[%c0_2, %c0_3] : memref<2x512xf32, #tpu.memory_space<vmem>>, vector<2x512xf32>
    %c0_4 = arith.constant 0 : index
    %c0_5 = arith.constant 0 : index
    %5 = vector.load %arg2[%c0_4, %c0_5] : memref<512x128xf32, #tpu.memory_space<vmem>>, vector<512x128xf32>
    %cst = arith.constant dense<0.000000e+00> : vector<2x128xf32>
    %6 = tpu.matmul %4, %5, %cst {dimension_numbers = #tpu.dot_dimension_numbers<[1], [0], [0], [1], [0, 0, 1, 1], [], []>} : vector<2x512xf32>, vector<512x128xf32>, vector<2x128xf32> -> vector<2x128xf32>
    %7 = arith.addf %3, %6 : vector<2x128xf32>
    %c0_6 = arith.constant 0 : index
    %c0_7 = arith.constant 0 : index
    %8 = vector.load %arg7[%c0_6, %c0_7] : memref<2x128xf32, #tpu.memory_space<vmem>>, vector<2x128xf32>
    tpu.vector_store %arg7[%c0_6, %c0_7], %7 {strides = array<i32>} : memref<2x128xf32, #tpu.memory_space<vmem>>, vector<2x128xf32>,
    %c0_i32_8 = arith.constant 0 : i32
    %9 = arith.cmpi eq, %arg0, %c0_i32_8 : i32
    %10 = arith.extui %9 : i1 to i32
    %c0_i32_9 = arith.constant 0 : i32
    %11 = arith.cmpi ne, %10, %c0_i32_9 : i32
    scf.if %11 {
      %c0_10 = arith.constant 0 : index
      %c0_11 = arith.constant 0 : index
      %12 = vector.load %arg7[%c0_10, %c0_11] : memref<2x128xf32, #tpu.memory_space<vmem>>, vector<2x128xf32>
      %c0_12 = arith.constant 0 : index
      %c0_13 = arith.constant 0 : index
      %13 = vector.load %arg3[%c0_12, %c0_13] : memref<1x128xf32, #tpu.memory_space<vmem>>, vector<1x128xf32>
      %14 = vector.broadcast %13 : vector<1x128xf32> to vector<2x128xf32>
      %15 = arith.addf %12, %14 : vector<2x128xf32>
      %cst_14 = arith.constant 0.000000e+00 : f32
      %16 = vector.broadcast %cst_14 : f32 to vector<2x128xf32>
      %17 = arith.maximumf %15, %16 : vector<2x128xf32>
      %c0_15 = arith.constant 0 : index
      %c0_16 = arith.constant 0 : index
      %18 = vector.load %arg4[%c0_15, %c0_16] : memref<128x128xf32, #tpu.memory_space<vmem>>, vector<128x128xf32>
      %cst_17 = arith.constant dense<0.000000e+00> : vector<2x128xf32>
      %19 = tpu.matmul %17, %18, %cst_17 {dimension_numbers = #tpu.dot_dimension_numbers<[1], [0], [0], [1], [0, 0, 1, 1], [], []>} : vector<2x128xf32>, vector<128x128xf32>, vector<2x128xf32> -> vector<2x128xf32>
      %c0_18 = arith.constant 0 : index
      %c0_19 = arith.constant 0 : index
      %20 = vector.load %arg5[%c0_18, %c0_19] : memref<1x128xf32, #tpu.memory_space<vmem>>, vector<1x128xf32>
      %21 = vector.broadcast %20 : vector<1x128xf32> to vector<2x128xf32>
      %22 = arith.addf %19, %21 : vector<2x128xf32>
      %c0_20 = arith.constant 0 : index
      %c0_21 = arith.constant 0 : index
      %23 = vector.load %arg6[%c0_20, %c0_21] : memref<2x128xf32, #tpu.memory_space<vmem>>, vector<2x128xf32>
      tpu.vector_store %arg6[%c0_20, %c0_21], %22 {strides = array<i32>} : memref<2x128xf32, #tpu.memory_space<vmem>>, vector<2x128xf32>,
    } else {
    }
    return
  }
  func.func @transform_0(%arg0: i32) -> (i32, i32) {
    %c0_i32 = arith.constant 0 : i32
    %c0_i32_0 = arith.constant 0 : i32
    return %c0_i32, %arg0 : i32, i32
  }
  func.func @transform_1(%arg0: i32) -> (i32, i32) {
    %c0_i32 = arith.constant 0 : i32
    %c0_i32_0 = arith.constant 0 : i32
    return %arg0, %c0_i32 : i32, i32
  }
  func.func @transform_2(%arg0: i32) -> (i32, i32) {
    %c0_i32 = arith.constant 0 : i32
    %c0_i32_0 = arith.constant 0 : i32
    %c0_i32_1 = arith.constant 0 : i32
    return %c0_i32, %c0_i32_0 : i32, i32
  }
  func.func @transform_3(%arg0: i32) -> (i32, i32) {
    %c0_i32 = arith.constant 0 : i32
    %c0_i32_0 = arith.constant 0 : i32
    %c0_i32_1 = arith.constant 0 : i32
    return %c0_i32, %c0_i32_0 : i32, i32
  }
  func.func @transform_4(%arg0: i32) -> (i32, i32) {
    %c0_i32 = arith.constant 0 : i32
    %c0_i32_0 = arith.constant 0 : i32
    %c0_i32_1 = arith.constant 0 : i32
    return %c0_i32, %c0_i32_0 : i32, i32
  }
  func.func @transform_5(%arg0: i32) -> (i32, i32) {
    %c0_i32 = arith.constant 0 : i32
    %c0_i32_0 = arith.constant 0 : i32
    %c0_i32_1 = arith.constant 0 : i32
    return %c0_i32, %c0_i32_0 : i32, i32
  }
}

</mosaic_0001>

<llo_original>
// kernel: cnn1d_forward.5
$region0: #{cnn1d_forward.5}
  #allocation0 [shape = 'u32[]', space=smem, size = 0x4, offset = 0x4, fixed_abs, tag = 'smem constant byte address 0x4 - core index']
  #allocation1 [shape = 'u32[72,128]{1,0:T(1,128)}', space=vmem, size = 0x9000, scoped, tag = 'internal scratch']
  #allocation2 [shape = 'f32[16,128]{1,0:T(8,128)}', space=vmem, size = 0x2000, scoped, tag = 'scratch operand']
  %s0 = inlined_call_operand.vmem [shape: f32[16,128], index: 0, kind: input, shape index: {}]
  %s1 = inlined_call_operand.hbm [shape: f32[128,384], index: 1, kind: input, shape index: {}]
  %s2 = inlined_call_operand.vmem [shape: f32[1,128], index: 2, kind: input, shape index: {}]
  %s3 = inlined_call_operand.vmem [shape: f32[8,128], index: 3, kind: output, shape index: {}]
  %s4 = sld [smem:[#allocation0]]
  $region26: #{cnn1d_forward.5} parent=0
    _
  %s6 = ssub.s32 1, %s4
  %s7 = scalar_select 0, %s6, %s4
  $region1: #{cnn1d_forward.5} parent=0
    #allocation3 [shape = 'u8[196608]{0}', space=vmem, size = 0x30000, scoped, tag = 'input window, operand 1, single buffered']
    #allocation4 [shape = 's32[1]{0}', space=sflag, size = 0x4, scoped, tag = 'scoped memory for cnn1d_forward.5']
    %8 = vsyncpa [#allocation4], 0
    // Predicated region
    $region2: #{cnn1d_forward.5} parent=1 // pred_check
      _
    $region3: #{cnn1d_forward.5} parent=1 // pred_check_branch
      %10 = sbr.rel (0) target = $region5
    $region4: #{cnn1d_forward.5} parent=1 // pred_region
      _
    $region5: #{cnn1d_forward.5} parent=1 // pred_fallthru
      _
    // Predicated region
    $region6: #{cnn1d_forward.5} parent=1 // pred_check
      _
    $region7: #{cnn1d_forward.5} parent=1 // pred_check_branch
      %12 = sbr.rel (0) target = $region9
    $region8: #{cnn1d_forward.5} parent=1 // pred_region
      %14 = vsyncadd [#allocation4], 0
      %s15 = sshll.u32 %s1, 4
      %s16 = int_to_ptr.hbm [resolvable:$true] %s15
      %s17 = sshll.u32 [#allocation3], 4
      %s18 = int_to_ptr.vmem [resolvable:$true] %s17
      %23 = dma.hbm_to_vmem [thread:$0]  %s16, 6144, %s18, [#allocation4], 384, 384, 24
    $region9: #{cnn1d_forward.5} parent=1 // pred_fallthru
      _
    // Predicated region
    $region10: #{cnn1d_forward.5} parent=1 // pred_check
      _
    $region11: #{cnn1d_forward.5} parent=1 // pred_check_branch
      %25 = sbr.rel (0) target = $region13
    $region12: #{cnn1d_forward.5} parent=1 // pred_region
      _
    $region13: #{cnn1d_forward.5} parent=1 // pred_fallthru
      _
    // Predicated region
    $region14: #{cnn1d_forward.5} parent=1 // pred_check
      _
    $region15: #{cnn1d_forward.5} parent=1 // pred_check_branch
      %27 = sbr.rel (0) target = $region17
    $region16: #{cnn1d_forward.5} parent=1 // pred_region
      %29 = dma.done [#allocation4], 6144
    $region17: #{cnn1d_forward.5} parent=1 // pred_fallthru
      _
    %v30 = vld [vmem:[%s0] sm:$0xff]
    %v31 = vld [vmem:[%s0 + $0x8] sm:$0xff]
    %v32 = vld [vmem:[#allocation3] sm:$0xff]
    %v33 = vld [vmem:[#allocation3 + $0x8] sm:$0xff]
    %v34 = vld [vmem:[#allocation3 + $0x10] sm:$0xff]
    %v35 = vld [vmem:[#allocation3 + $0x18] sm:$0xff]
    %v36 = vld [vmem:[#allocation3 + $0x20] sm:$0xff]
    %v37 = vld [vmem:[#allocation3 + $0x28] sm:$0xff]
    %v38 = vld [vmem:[#allocation3 + $0x30] sm:$0xff]
    %v39 = vld [vmem:[#allocation3 + $0x38] sm:$0xff]
    %v40 = vld [vmem:[#allocation3 + $0x40] sm:$0xff]
    %v41 = vld [vmem:[#allocation3 + $0x48] sm:$0xff]
    %v42 = vld [vmem:[#allocation3 + $0x50] sm:$0xff]
    %v43 = vld [vmem:[#allocation3 + $0x58] sm:$0xff]
    %v44 = vld [vmem:[#allocation3 + $0x60] sm:$0xff]
    %v45 = vld [vmem:[#allocation3 + $0x68] sm:$0xff]
    %v46 = vld [vmem:[#allocation3 + $0x70] sm:$0xff]
    %v47 = vld [vmem:[#allocation3 + $0x78] sm:$0xff]
    %v48 = vld [vmem:[#allocation3 + $0x80] sm:$0xff]
    %v49 = vld [vmem:[#allocation3 + $0x88] sm:$0xff]
    %v50 = vld [vmem:[#allocation3 + $0x90] sm:$0xff]
    %v51 = vld [vmem:[#allocation3 + $0x98] sm:$0xff]
    %v52 = vld [vmem:[#allocation3 + $0xa0] sm:$0xff]
    %v53 = vld [vmem:[#allocation3 + $0xa8] sm:$0xff]
    %v54 = vld [vmem:[#allocation3 + $0xb0] sm:$0xff]
    %v55 = vld [vmem:[#allocation3 + $0xb8] sm:$0xff]
    %v56 = vld [vmem:[#allocation3 + $0xc0] sm:$0xff]
    %v57 = vld [vmem:[#allocation3 + $0xc8] sm:$0xff]
    %v58 = vld [vmem:[#allocation3 + $0xd0] sm:$0xff]
    %v59 = vld [vmem:[#allocation3 + $0xd8] sm:$0xff]
    %v60 = vld [vmem:[#allocation3 + $0xe0] sm:$0xff]
    %v61 = vld [vmem:[#allocation3 + $0xe8] sm:$0xff]
    %v62 = vld [vmem:[#allocation3 + $0xf0] sm:$0xff]
    %v63 = vld [vmem:[#allocation3 + $0xf8] sm:$0xff]
    %v64 = vld [vmem:[#allocation3 + $0x100] sm:$0xff]
    %v65 = vld [vmem:[#allocation3 + $0x108] sm:$0xff]
    %v66 = vld [vmem:[#allocation3 + $0x110] sm:$0xff]
    %v67 = vld [vmem:[#allocation3 + $0x118] sm:$0xff]
    %v68 = vld [vmem:[#allocation3 + $0x120] sm:$0xff]
    %v69 = vld [vmem:[#allocation3 + $0x128] sm:$0xff]
    %v70 = vld [vmem:[#allocation3 + $0x130] sm:$0xff]
    %v71 = vld [vmem:[#allocation3 + $0x138] sm:$0xff]
    %v72 = vld [vmem:[#allocation3 + $0x140] sm:$0xff]
    %v73 = vld [vmem:[#allocation3 + $0x148] sm:$0xff]
    %v74 = vld [vmem:[#allocation3 + $0x150] sm:$0xff]
    %v75 = vld [vmem:[#allocation3 + $0x158] sm:$0xff]
    %v76 = vld [vmem:[#allocation3 + $0x160] sm:$0xff]
    %v77 = vld [vmem:[#allocation3 + $0x168] sm:$0xff]
    %v78 = vld [vmem:[#allocation3 + $0x170] sm:$0xff]
    %v79 = vld [vmem:[#allocation3 + $0x178] sm:$0xff]
    %80 = vmatpush.msra.mxu0 %v77
    %81 = vmatpush.msra.mxu0 %v74
    %82 = vmatpush.msra.mxu0 %v71
    %83 = vmatpush.msra.mxu0 %v68
    %84 = vmatpush.msra.mxu0 %v65
    %85 = vmatpush.msra.mxu0 %v62
    %86 = vmatpush.msra.mxu0 %v59
    %87 = vmatpush.msra.mxu0 %v56
    %88 = vmatpush.msra.mxu0 %v53
    %89 = vmatpush.msra.mxu0 %v50
    %90 = vmatpush.msra.mxu0 %v47
    %91 = vmatpush.msra.mxu0 %v44
    %92 = vmatpush.msra.mxu0 %v41
    %93 = vmatpush.msra.mxu0 %v38
    %94 = vmatpush.msra.mxu0 %v35
    %95 = vmatpush.msra.mxu0 %v32
    %96 = vmatmul.f32.gmra.mxu0 %v30
    %v97 = vpop.f32.mrf.mxu0
    %v98 = vadd.f32 0.0, %v97
    %99 = vmatmul.f32.gmra.mxu0 %v31
    %v100 = vpop.f32.mrf.mxu0
    %v101 = vadd.f32 0.0, %v100
    %102 = vdwg.mxu0
    %103 = vmatpush.msra.mxu0 %v78
    %104 = vmatpush.msra.mxu0 %v75
    %105 = vmatpush.msra.mxu0 %v72
    %106 = vmatpush.msra.mxu0 %v69
    %107 = vmatpush.msra.mxu0 %v66
    %108 = vmatpush.msra.mxu0 %v63
    %109 = vmatpush.msra.mxu0 %v60
    %110 = vmatpush.msra.mxu0 %v57
    %111 = vmatpush.msra.mxu0 %v54
    %112 = vmatpush.msra.mxu0 %v51
    %113 = vmatpush.msra.mxu0 %v48
    %114 = vmatpush.msra.mxu0 %v45
    %115 = vmatpush.msra.mxu0 %v42
    %116 = vmatpush.msra.mxu0 %v39
    %117 = vmatpush.msra.mxu0 %v36
    %118 = vmatpush.msra.mxu0 %v33
    %119 = vmatmul.f32.gmra.mxu0 %v30
    %v120 = vpop.f32.mrf.mxu0
    %v121 = vadd.f32 0.0, %v120
    %122 = vmatmul.f32.gmra.mxu0 %v31
    %v123 = vpop.f32.mrf.mxu0
    %v124 = vadd.f32 0.0, %v123
    %125 = vdwg.mxu0
    %126 = vmatpush.msra.mxu0 %v79
    %127 = vmatpush.msra.mxu0 %v76
    %128 = vmatpush.msra.mxu0 %v73
    %129 = vmatpush.msra.mxu0 %v70
    %130 = vmatpush.msra.mxu0 %v67
    %131 = vmatpush.msra.mxu0 %v64
    %132 = vmatpush.msra.mxu0 %v61
    %133 = vmatpush.msra.mxu0 %v58
    %134 = vmatpush.msra.mxu0 %v55
    %135 = vmatpush.msra.mxu0 %v52
    %136 = vmatpush.msra.mxu0 %v49
    %137 = vmatpush.msra.mxu0 %v46
    %138 = vmatpush.msra.mxu0 %v43
    %139 = vmatpush.msra.mxu0 %v40
    %140 = vmatpush.msra.mxu0 %v37
    %141 = vmatpush.msra.mxu0 %v34
    %142 = vmatmul.f32.gmra.mxu0 %v30
    %v143 = vpop.f32.mrf.mxu0
    %v144 = vadd.f32 0.0, %v143
    %145 = vmatmul.f32.gmra.mxu0 %v31
    %v146 = vpop.f32.mrf.mxu0
    %v147 = vadd.f32 0.0, %v146
    %148 = vdwg.mxu0
    %v149 = vlaneseq
    %v150 = vshrl.u32 %v149, 7
    %v151 = vadd.s32 %v150, 8
    %vm152 = vcmp.lt.s32.totalorder %v150, 0
    %v153 = vsub.s32 0, %v150
    %v154 = vsel %vm152, %v153, %v150
    %v155 = vshrl.u32 %v154, 3
    %v156 = vand.u32 %v154, 7
    %v157 = vsub.s32 0, %v156
    %v158 = vsel %vm152, %v157, %v156
    %vm159 = vcmp.lt.s32.totalorder %v151, 0
    %v160 = vsub.s32 0, %v151
    %v161 = vsel %vm159, %v160, %v151
    %v162 = vshrl.u32 %v161, 3
    %v163 = vand.u32 %v161, 7
    %v164 = vsub.s32 0, %v163
    %v165 = vsel %vm159, %v164, %v163
    %vm166 = vcmp.ne.s32.totalorder %v158, 0
    %vm167 = vcmp.ne.s32.totalorder %v165, 0
    %vm168 = vcmp.lt.s32.totalorder %v158, 0
    %vm169 = vcmp.lt.s32.totalorder %v165, 0
    %vm170 = vmand %vm168, %vm166
    %vm171 = vmand %vm169, %vm167
    %v172 = vadd.s32 %v158, 8
    %v173 = vadd.s32 %v165, 8
    %v174 = vsel %vm170, %v172, %v158
    %v175 = vsel %vm171, %v173, %v165
    %vm176 = vcmp.eq.s32.totalorder %v174, 0
    %vm177 = vcmp.eq.s32.totalorder %v175, 0
    %v179 = vrot.slane %v101, 7
    %vm182 = vcmask 1040384
    %v183 = vrot.slane %v98, 7
    %v184 = vsel %vm182, %v183, %v179
    %v187 = vsel %vm182, %v179, %v183
    %v188 = vsel %vm176, 0.0, %v187
    %v189 = vsel %vm177, 0.0, %v184
    %v190 = vadd.f32 %v121, %v188
    %v191 = vadd.f32 %v124, %v189
    %vm192 = vcmp.eq.s32.totalorder %v174, 7
    %vm193 = vcmp.eq.s32.totalorder %v175, 7
    %vm196 = vcmask 1046528
    %v197 = vrot.slane %v144, 1
    %v198 = vrot.slane %v147, 1
    %v199 = vsel %vm196, %v197, %v198
    %v203 = vsel %vm196, %v198, %v197
    %v204 = vsel %vm192, 0.0, %v199
    %v205 = vsel %vm193, 0.0, %v203
    %v206 = vadd.f32 %v190, %v204
    %v207 = vadd.f32 %v191, %v205
    %v210 = vrot.slane %v206, 1
    %v211 = vrot.slane %v207, 1
    %v212 = vsel %vm196, %v210, %v211
    %v216 = vsel %vm196, %v211, %v210
    %v217 = vmax.f32 %v206, %v212
    %v218 = vmax.f32 %v207, %v216
    %219 = vst [vmem:[#allocation2] sm:$0xff] %v217
    %220 = vst [vmem:[#allocation2 + $0x8] sm:$0xff] %v218
    %v221 = vld [vmem:[#allocation2] ss:$2 sm:$0xff]
    %v222 = vld [vmem:[%s2] sm:$0x1]
    %v224 = vperm.slane %v222, 0
    %v226 = vadd.f32 %v221, %v224
    %v227 = vmax.f32 %v226, 0.0
    %228 = vst [vmem:[%s3] sm:$0xff] %v227
    // Predicated region
    $region18: #{cnn1d_forward.5} parent=1 // pred_check
      _
    $region19: #{cnn1d_forward.5} parent=1 // pred_check_branch
      %230 = sbr.rel (0) target = $region21
    $region20: #{cnn1d_forward.5} parent=1 // pred_region
      _
    $region21: #{cnn1d_forward.5} parent=1 // pred_fallthru
      _
    // Predicated region
    $region22: #{cnn1d_forward.5} parent=1 // pred_check
      _
    $region23: #{cnn1d_forward.5} parent=1 // pred_check_branch
      %232 = sbr.rel (0) target = $region25
    $region24: #{cnn1d_forward.5} parent=1 // pred_region
      _
    $region25: #{cnn1d_forward.5} parent=1 // pred_fallthru
      _
    %233 = vsyncpa [#allocation4], 1

// kernel: cnn1d_forward.6
$region0: #{cnn1d_forward.6}
  #allocation0 [shape = 'u32[]', space=smem, size = 0x4, offset = 0x4, fixed_abs, tag = 'smem constant byte address 0x4 - core index']
  #allocation1 [shape = 'u32[72,128]{1,0:T(1,128)}', space=vmem, size = 0x9000, scoped, tag = 'internal scratch']
  %s0 = inlined_call_operand.vmem [shape: f32[8,128], index: 0, kind: input, shape index: {}]
  %s1 = inlined_call_operand.hbm [shape: f32[128,384], index: 1, kind: input, shape index: {}]
  %s2 = inlined_call_operand.vmem [shape: f32[1,128], index: 2, kind: input, shape index: {}]
  %s3 = inlined_call_operand.vmem [shape: f32[8,128], index: 3, kind: output, shape index: {}]
  %s4 = sld [smem:[#allocation0]]
  $region26: #{cnn1d_forward.6} parent=0
    _
  %s6 = ssub.s32 1, %s4
  %s7 = scalar_select 0, %s6, %s4
  $region1: #{cnn1d_forward.6} parent=0
    #allocation2 [shape = 'u8[196608]{0}', space=vmem, size = 0x30000, scoped, tag = 'input window, operand 1, single buffered']
    #allocation3 [shape = 's32[1]{0}', space=sflag, size = 0x4, scoped, tag = 'scoped memory for cnn1d_forward.6']
    %8 = vsyncpa [#allocation3], 0
    // Predicated region
    $region2: #{cnn1d_forward.6} parent=1 // pred_check
      _
    $region3: #{cnn1d_forward.6} parent=1 // pred_check_branch
      %10 = sbr.rel (0) target = $region5
    $region4: #{cnn1d_forward.6} parent=1 // pred_region
      _
    $region5: #{cnn1d_forward.6} parent=1 // pred_fallthru
      _
    // Predicated region
    $region6: #{cnn1d_forward.6} parent=1 // pred_check
      _
    $region7: #{cnn1d_forward.6} parent=1 // pred_check_branch
      %12 = sbr.rel (0) target = $region9
    $region8: #{cnn1d_forward.6} parent=1 // pred_region
      %14 = vsyncadd [#allocation3], 0
      %s15 = sshll.u32 %s1, 4
      %s16 = int_to_ptr.hbm [resolvable:$true] %s15
      %s17 = sshll.u32 [#allocation2], 4
      %s18 = int_to_ptr.vmem [resolvable:$true] %s17
      %23 = dma.hbm_to_vmem [thread:$0]  %s16, 6144, %s18, [#allocation3], 384, 384, 24
    $region9: #{cnn1d_forward.6} parent=1 // pred_fallthru
      _
    // Predicated region
    $region10: #{cnn1d_forward.6} parent=1 // pred_check
      _
    $region11: #{cnn1d_forward.6} parent=1 // pred_check_branch
      %25 = sbr.rel (0) target = $region13
    $region12: #{cnn1d_forward.6} parent=1 // pred_region
      _
    $region13: #{cnn1d_forward.6} parent=1 // pred_fallthru
      _
    // Predicated region
    $region14: #{cnn1d_forward.6} parent=1 // pred_check
      _
    $region15: #{cnn1d_forward.6} parent=1 // pred_check_branch
      %27 = sbr.rel (0) target = $region17
    $region16: #{cnn1d_forward.6} parent=1 // pred_region
      %29 = dma.done [#allocation3], 6144
    $region17: #{cnn1d_forward.6} parent=1 // pred_fallthru
      _
    %v30 = vld [vmem:[%s0] sm:$0xff]
    %v31 = vld [vmem:[#allocation2] sm:$0xff]
    %v32 = vld [vmem:[#allocation2 + $0x8] sm:$0xff]
    %v33 = vld [vmem:[#allocation2 + $0x10] sm:$0xff]
    %v34 = vld [vmem:[#allocation2 + $0x18] sm:$0xff]
    %v35 = vld [vmem:[#allocation2 + $0x20] sm:$0xff]
    %v36 = vld [vmem:[#allocation2 + $0x28] sm:$0xff]
    %v37 = vld [vmem:[#allocation2 + $0x30] sm:$0xff]
    %v38 = vld [vmem:[#allocation2 + $0x38] sm:$0xff]
    %v39 = vld [vmem:[#allocation2 + $0x40] sm:$0xff]
    %v40 = vld [vmem:[#allocation2 + $0x48] sm:$0xff]
    %v41 = vld [vmem:[#allocation2 + $0x50] sm:$0xff]
    %v42 = vld [vmem:[#allocation2 + $0x58] sm:$0xff]
    %v43 = vld [vmem:[#allocation2 + $0x60] sm:$0xff]
    %v44 = vld [vmem:[#allocation2 + $0x68] sm:$0xff]
    %v45 = vld [vmem:[#allocation2 + $0x70] sm:$0xff]
    %v46 = vld [vmem:[#allocation2 + $0x78] sm:$0xff]
    %v47 = vld [vmem:[#allocation2 + $0x80] sm:$0xff]
    %v48 = vld [vmem:[#allocation2 + $0x88] sm:$0xff]
    %v49 = vld [vmem:[#allocation2 + $0x90] sm:$0xff]
    %v50 = vld [vmem:[#allocation2 + $0x98] sm:$0xff]
    %v51 = vld [vmem:[#allocation2 + $0xa0] sm:$0xff]
    %v52 = vld [vmem:[#allocation2 + $0xa8] sm:$0xff]
    %v53 = vld [vmem:[#allocation2 + $0xb0] sm:$0xff]
    %v54 = vld [vmem:[#allocation2 + $0xb8] sm:$0xff]
    %v55 = vld [vmem:[#allocation2 + $0xc0] sm:$0xff]
    %v56 = vld [vmem:[#allocation2 + $0xc8] sm:$0xff]
    %v57 = vld [vmem:[#allocation2 + $0xd0] sm:$0xff]
    %v58 = vld [vmem:[#allocation2 + $0xd8] sm:$0xff]
    %v59 = vld [vmem:[#allocation2 + $0xe0] sm:$0xff]
    %v60 = vld [vmem:[#allocation2 + $0xe8] sm:$0xff]
    %v61 = vld [vmem:[#allocation2 + $0xf0] sm:$0xff]
    %v62 = vld [vmem:[#allocation2 + $0xf8] sm:$0xff]
    %v63 = vld [vmem:[#allocation2 + $0x100] sm:$0xff]
    %v64 = vld [vmem:[#allocation2 + $0x108] sm:$0xff]
    %v65 = vld [vmem:[#allocation2 + $0x110] sm:$0xff]
    %v66 = vld [vmem:[#allocation2 + $0x118] sm:$0xff]
    %v67 = vld [vmem:[#allocation2 + $0x120] sm:$0xff]
    %v68 = vld [vmem:[#allocation2 + $0x128] sm:$0xff]
    %v69 = vld [vmem:[#allocation2 + $0x130] sm:$0xff]
    %v70 = vld [vmem:[#allocation2 + $0x138] sm:$0xff]
    %v71 = vld [vmem:[#allocation2 + $0x140] sm:$0xff]
    %v72 = vld [vmem:[#allocation2 + $0x148] sm:$0xff]
    %v73 = vld [vmem:[#allocation2 + $0x150] sm:$0xff]
    %v74 = vld [vmem:[#allocation2 + $0x158] sm:$0xff]
    %v75 = vld [vmem:[#allocation2 + $0x160] sm:$0xff]
    %v76 = vld [vmem:[#allocation2 + $0x168] sm:$0xff]
    %v77 = vld [vmem:[#allocation2 + $0x170] sm:$0xff]
    %v78 = vld [vmem:[#allocation2 + $0x178] sm:$0xff]
    %79 = vmatpush.msra.mxu0 %v76
    %80 = vmatpush.msra.mxu0 %v73
    %81 = vmatpush.msra.mxu0 %v70
    %82 = vmatpush.msra.mxu0 %v67
    %83 = vmatpush.msra.mxu0 %v64
    %84 = vmatpush.msra.mxu0 %v61
    %85 = vmatpush.msra.mxu0 %v58
    %86 = vmatpush.msra.mxu0 %v55
    %87 = vmatpush.msra.mxu0 %v52
    %88 = vmatpush.msra.mxu0 %v49
    %89 = vmatpush.msra.mxu0 %v46
    %90 = vmatpush.msra.mxu0 %v43
    %91 = vmatpush.msra.mxu0 %v40
    %92 = vmatpush.msra.mxu0 %v37
    %93 = vmatpush.msra.mxu0 %v34
    %94 = vmatpush.msra.mxu0 %v31
    %95 = vmatmul.f32.gmra.mxu0 %v30
    %v96 = vpop.f32.mrf.mxu0
    %v97 = vadd.f32 0.0, %v96
    %98 = vdwg.mxu0
    %99 = vmatpush.msra.mxu0 %v77
    %100 = vmatpush.msra.mxu0 %v74
    %101 = vmatpush.msra.mxu0 %v71
    %102 = vmatpush.msra.mxu0 %v68
    %103 = vmatpush.msra.mxu0 %v65
    %104 = vmatpush.msra.mxu0 %v62
    %105 = vmatpush.msra.mxu0 %v59
    %106 = vmatpush.msra.mxu0 %v56
    %107 = vmatpush.msra.mxu0 %v53
    %108 = vmatpush.msra.mxu0 %v50
    %109 = vmatpush.msra.mxu0 %v47
    %110 = vmatpush.msra.mxu0 %v44
    %111 = vmatpush.msra.mxu0 %v41
    %112 = vmatpush.msra.mxu0 %v38
    %113 = vmatpush.msra.mxu0 %v35
    %114 = vmatpush.msra.mxu0 %v32
    %115 = vmatmul.f32.gmra.mxu0 %v30
    %v116 = vpop.f32.mrf.mxu0
    %v117 = vadd.f32 0.0, %v116
    %118 = vdwg.mxu0
    %119 = vmatpush.msra.mxu0 %v78
    %120 = vmatpush.msra.mxu0 %v75
    %121 = vmatpush.msra.mxu0 %v72
    %122 = vmatpush.msra.mxu0 %v69
    %123 = vmatpush.msra.mxu0 %v66
    %124 = vmatpush.msra.mxu0 %v63
    %125 = vmatpush.msra.mxu0 %v60
    %126 = vmatpush.msra.mxu0 %v57
    %127 = vmatpush.msra.mxu0 %v54
    %128 = vmatpush.msra.mxu0 %v51
    %129 = vmatpush.msra.mxu0 %v48
    %130 = vmatpush.msra.mxu0 %v45
    %131 = vmatpush.msra.mxu0 %v42
    %132 = vmatpush.msra.mxu0 %v39
    %133 = vmatpush.msra.mxu0 %v36
    %134 = vmatpush.msra.mxu0 %v33
    %135 = vmatmul.f32.gmra.mxu0 %v30
    %v136 = vpop.f32.mrf.mxu0
    %v137 = vadd.f32 0.0, %v136
    %138 = vdwg.mxu0
    %v139 = vlaneseq
    %v140 = vshrl.u32 %v139, 7
    %vm141 = vcmp.lt.s32.totalorder %v140, 0
    %v142 = vsub.s32 0, %v140
    %v143 = vsel %vm141, %v142, %v140
    %v144 = vshrl.u32 %v143, 2
    %v145 = vand.u32 %v143, 3
    %v146 = vsub.s32 0, %v145
    %v147 = vsel %vm141, %v146, %v145
    %vm148 = vcmp.ne.s32.totalorder %v147, 0
    %vm149 = vcmp.lt.s32.totalorder %v147, 0
    %vm150 = vmand %vm149, %vm148
    %v151 = vadd.s32 %v147, 4
    %v152 = vsel %vm150, %v151, %v147
    %vm153 = vcmp.eq.s32.totalorder %v152, 0
    %v155 = vrot.slane %v97, 7
    %vm157 = vcmask 1040384
    %v158 = vsel %vm157, %v155, %v155
    %v159 = vsel %vm153, 0.0, %v158
    %v160 = vadd.f32 %v117, %v159
    %vm161 = vcmp.eq.s32.totalorder %v152, 3
    %v163 = vrot.slane %v137, 1
    %vm165 = vcmask 1046528
    %v166 = vsel %vm165, %v163, %v163
    %v167 = vsel %vm161, 0.0, %v166
    %v168 = vadd.f32 %v160, %v167
    %v169 = vld [vmem:[%s2] sm:$0x1]
    %v171 = vperm.slane %v169, 0
    %v173 = vadd.f32 %v168, %v171
    %v174 = vmax.f32 %v173, 0.0
    %175 = vst [vmem:[%s3] sm:$0xff] %v174
    // Predicated region
    $region18: #{cnn1d_forward.6} parent=1 // pred_check
      _
    $region19: #{cnn1d_forward.6} parent=1 // pred_check_branch
      %177 = sbr.rel (0) target = $region21
    $region20: #{cnn1d_forward.6} parent=1 // pred_region
      _
    $region21: #{cnn1d_forward.6} parent=1 // pred_fallthru
      _
    // Predicated region
    $region22: #{cnn1d_forward.6} parent=1 // pred_check
      _
    $region23: #{cnn1d_forward.6} parent=1 // pred_check_branch
      %179 = sbr.rel (0) target = $region25
    $region24: #{cnn1d_forward.6} parent=1 // pred_region
      _
    $region25: #{cnn1d_forward.6} parent=1 // pred_fallthru
      _
    %180 = vsyncpa [#allocation3], 1

// kernel: cnn1d_forward.4
$region0: #{cnn1d_forward.4}
  #allocation0 [shape = 'u32[]', space=smem, size = 0x4, offset = 0x4, fixed_abs, tag = 'smem constant byte address 0x4 - core index']
  #allocation1 [shape = 'u32[72,128]{1,0:T(1,128)}', space=vmem, size = 0x9000, scoped, tag = 'internal scratch']
  #allocation2 [shape = 'f32[32,128]{1,0:T(8,128)}', space=vmem, size = 0x4000, scoped, tag = 'scratch operand']
  %s0 = inlined_call_operand.vmem [shape: f32[32,4], index: 0, kind: input, shape index: {}]
  %s1 = inlined_call_operand.vmem [shape: f32[4,384], index: 1, kind: input, shape index: {}]
  %s2 = inlined_call_operand.vmem [shape: f32[1,128], index: 2, kind: input, shape index: {}]
  %s3 = inlined_call_operand.vmem [shape: f32[16,128], index: 3, kind: output, shape index: {}]
  %s4 = sld [smem:[#allocation0]]
  $region22: #{cnn1d_forward.4} parent=0
    _
  %s6 = ssub.s32 1, %s4
  %s7 = scalar_select 0, %s6, %s4
  // Predicated region
  $region2: #{cnn1d_forward.4} parent=0 // pred_check
    _
  $region3: #{cnn1d_forward.4} parent=0 // pred_check_branch
    %9 = sbr.rel (0) target = $region5
  $region4: #{cnn1d_forward.4} parent=0 // pred_region
    _
  $region5: #{cnn1d_forward.4} parent=0 // pred_fallthru
    _
  // Predicated region
  $region6: #{cnn1d_forward.4} parent=0 // pred_check
    _
  $region7: #{cnn1d_forward.4} parent=0 // pred_check_branch
    %11 = sbr.rel (0) target = $region9
  $region8: #{cnn1d_forward.4} parent=0 // pred_region
    _
  $region9: #{cnn1d_forward.4} parent=0 // pred_fallthru
    _
  // Predicated region
  $region10: #{cnn1d_forward.4} parent=0 // pred_check
    _
  $region11: #{cnn1d_forward.4} parent=0 // pred_check_branch
    %13 = sbr.rel (0) target = $region13
  $region12: #{cnn1d_forward.4} parent=0 // pred_region
    _
  $region13: #{cnn1d_forward.4} parent=0 // pred_fallthru
    _
  %v14 = vld [vmem:[%s0] sm:$0xff]
  %v15 = vld [vmem:[%s0 + $0x8] sm:$0xff]
  %v16 = vld [vmem:[%s0 + $0x10] sm:$0xff]
  %v17 = vld [vmem:[%s0 + $0x18] sm:$0xff]
  %v18 = vld [vmem:[%s1] sm:$0xff]
  %v19 = vld [vmem:[%s1 + $0x8] sm:$0xf]
  %22 = vst [vmem:[#allocation1] ss:$2 sm:$0xff] %v18
  %s23 = scalar_lea.vmem [#allocation1], 16
  %24 = vst [vmem:[%s23] ss:$2 sm:$0xff] %v19
  %v25 = vld.sshfl [vmem:[#allocation1] sm:$0xff pattern:$0x75316420]
  %v26 = vld.sshfl [vmem:[#allocation1 + $0x8] sm:$0xff pattern:$0x75316420]
  %v27 = vld.sshfl [vmem:[#allocation1 + $0x10] sm:$0xff pattern:$0x75316420]
  %vm28 = vcmask 31744
  %v30 = vsel %vm28, %v14, 0
  %v33 = vsel %vm28, %v15, 0
  %v36 = vsel %vm28, %v16, 0
  %v39 = vsel %vm28, %v17, 0
  %vm41 = vcmask 1043456
  %v42 = vsel %vm41, %v25, 0
  %v44 = vsel %vm41, %v26, 0
  %v46 = vsel %vm41, %v27, 0
  %48 = vmatpush.msra.mxu0 0.0
  %49 = vmatpush.msra.mxu0 0.0
  %50 = vmatpush.msra.mxu0 0.0
  %51 = vmatpush.msra.mxu0 0.0
  %52 = vmatpush.msra.mxu0 0.0
  %53 = vmatpush.msra.mxu0 0.0
  %54 = vmatpush.msra.mxu0 0.0
  %55 = vmatpush.msra.mxu0 0.0
  %56 = vmatpush.msra.mxu0 0.0
  %57 = vmatpush.msra.mxu0 0.0
  %58 = vmatpush.msra.mxu0 0.0
  %59 = vmatpush.msra.mxu0 0.0
  %60 = vmatpush.msra.mxu0 0.0
  %61 = vmatpush.msra.mxu0 0.0
  %62 = vmatpush.msra.mxu0 0.0
  %63 = vmatpush.msra.mxu0 %v42
  %64 = vmatmul.f32.gmra.mxu0 %v30
  %v65 = vpop.f32.mrf.mxu0
  %v66 = vadd.f32 0.0, %v65
  %67 = vmatmul.f32.gmra.mxu0 %v33
  %v68 = vpop.f32.mrf.mxu0
  %v69 = vadd.f32 0.0, %v68
  %70 = vmatmul.f32.gmra.mxu0 %v36
  %v71 = vpop.f32.mrf.mxu0
  %v72 = vadd.f32 0.0, %v71
  %73 = vmatmul.f32.gmra.mxu0 %v39
  %v74 = vpop.f32.mrf.mxu0
  %v75 = vadd.f32 0.0, %v74
  %76 = vdwg.mxu0
  %77 = vmatpush.msra.mxu0 0.0
  %78 = vmatpush.msra.mxu0 0.0
  %79 = vmatpush.msra.mxu0 0.0
  %80 = vmatpush.msra.mxu0 0.0
  %81 = vmatpush.msra.mxu0 0.0
  %82 = vmatpush.msra.mxu0 0.0
  %83 = vmatpush.msra.mxu0 0.0
  %84 = vmatpush.msra.mxu0 0.0
  %85 = vmatpush.msra.mxu0 0.0
  %86 = vmatpush.msra.mxu0 0.0
  %87 = vmatpush.msra.mxu0 0.0
  %88 = vmatpush.msra.mxu0 0.0
  %89 = vmatpush.msra.mxu0 0.0
  %90 = vmatpush.msra.mxu0 0.0
  %91 = vmatpush.msra.mxu0 0.0
  %92 = vmatpush.msra.mxu0 %v44
  %93 = vmatmul.f32.gmra.mxu0 %v30
  %v94 = vpop.f32.mrf.mxu0
  %v95 = vadd.f32 0.0, %v94
  %96 = vmatmul.f32.gmra.mxu0 %v33
  %v97 = vpop.f32.mrf.mxu0
  %v98 = vadd.f32 0.0, %v97
  %99 = vmatmul.f32.gmra.mxu0 %v36
  %v100 = vpop.f32.mrf.mxu0
  %v101 = vadd.f32 0.0, %v100
  %102 = vmatmul.f32.gmra.mxu0 %v39
  %v103 = vpop.f32.mrf.mxu0
  %v104 = vadd.f32 0.0, %v103
  %105 = vdwg.mxu0
  %106 = vmatpush.msra.mxu0 0.0
  %107 = vmatpush.msra.mxu0 0.0
  %108 = vmatpush.msra.mxu0 0.0
  %109 = vmatpush.msra.mxu0 0.0
  %110 = vmatpush.msra.mxu0 0.0
  %111 = vmatpush.msra.mxu0 0.0
  %112 = vmatpush.msra.mxu0 0.0
  %113 = vmatpush.msra.mxu0 0.0
  %114 = vmatpush.msra.mxu0 0.0
  %115 = vmatpush.msra.mxu0 0.0
  %116 = vmatpush.msra.mxu0 0.0
  %117 = vmatpush.msra.mxu0 0.0
  %118 = vmatpush.msra.mxu0 0.0
  %119 = vmatpush.msra.mxu0 0.0
  %120 = vmatpush.msra.mxu0 0.0
  %121 = vmatpush.msra.mxu0 %v46
  %122 = vmatmul.f32.gmra.mxu0 %v30
  %v123 = vpop.f32.mrf.mxu0
  %v124 = vadd.f32 0.0, %v123
  %125 = vmatmul.f32.gmra.mxu0 %v33
  %v126 = vpop.f32.mrf.mxu0
  %v127 = vadd.f32 0.0, %v126
  %128 = vmatmul.f32.gmra.mxu0 %v36
  %v129 = vpop.f32.mrf.mxu0
  %v130 = vadd.f32 0.0, %v129
  %131 = vmatmul.f32.gmra.mxu0 %v39
  %v132 = vpop.f32.mrf.mxu0
  %v133 = vadd.f32 0.0, %v132
  %134 = vdwg.mxu0
  %v135 = vlaneseq
  %v136 = vshrl.u32 %v135, 7
  %v137 = vadd.s32 %v136, 8
  %v138 = vadd.s32 %v136, 16
  %v139 = vadd.s32 %v136, 24
  %vm140 = vcmp.lt.s32.totalorder %v136, 0
  %v141 = vsub.s32 0, %v136
  %v142 = vsel %vm140, %v141, %v136
  %v143 = vshrl.u32 %v142, 4
  %v144 = vand.u32 %v142, 15
  %v145 = vsub.s32 0, %v144
  %v146 = vsel %vm140, %v145, %v144
  %vm147 = vcmp.lt.s32.totalorder %v137, 0
  %v148 = vsub.s32 0, %v137
  %v149 = vsel %vm147, %v148, %v137
  %v150 = vshrl.u32 %v149, 4
  %v151 = vand.u32 %v149, 15
  %v152 = vsub.s32 0, %v151
  %v153 = vsel %vm147, %v152, %v151
  %vm154 = vcmp.lt.s32.totalorder %v138, 0
  %v155 = vsub.s32 0, %v138
  %v156 = vsel %vm154, %v155, %v138
  %v157 = vshrl.u32 %v156, 4
  %v158 = vand.u32 %v156, 15
  %v159 = vsub.s32 0, %v158
  %v160 = vsel %vm154, %v159, %v158
  %vm161 = vcmp.lt.s32.totalorder %v139, 0
  %v162 = vsub.s32 0, %v139
  %v163 = vsel %vm161, %v162, %v139
  %v164 = vshrl.u32 %v163, 4
  %v165 = vand.u32 %v163, 15
  %v166 = vsub.s32 0, %v165
  %v167 = vsel %vm161, %v166, %v165
  %vm168 = vcmp.ne.s32.totalorder %v146, 0
  %vm169 = vcmp.ne.s32.totalorder %v153, 0
  %vm170 = vcmp.ne.s32.totalorder %v160, 0
  %vm171 = vcmp.ne.s32.totalorder %v167, 0
  %vm172 = vcmp.lt.s32.totalorder %v146, 0
  %vm173 = vcmp.lt.s32.totalorder %v153, 0
  %vm174 = vcmp.lt.s32.totalorder %v160, 0
  %vm175 = vcmp.lt.s32.totalorder %v167, 0
  %vm176 = vmand %vm172, %vm168
  %vm177 = vmand %vm173, %vm169
  %vm178 = vmand %vm174, %vm170
  %vm179 = vmand %vm175, %vm171
  %v180 = vadd.s32 %v146, 16
  %v181 = vadd.s32 %v153, 16
  %v182 = vadd.s32 %v160, 16
  %v183 = vadd.s32 %v167, 16
  %v184 = vsel %vm176, %v180, %v146
  %v185 = vsel %vm177, %v181, %v153
  %v186 = vsel %vm178, %v182, %v160
  %v187 = vsel %vm179, %v183, %v167
  %vm188 = vcmp.eq.s32.totalorder %v184, 0
  %vm189 = vcmp.eq.s32.totalorder %v185, 0
  %vm190 = vcmp.eq.s32.totalorder %v186, 0
  %vm191 = vcmp.eq.s32.totalorder %v187, 0
  %v193 = vrot.slane %v75, 7
  %vm198 = vcmask 1040384
  %v199 = vrot.slane %v66, 7
  %v200 = vrot.slane %v69, 7
  %v201 = vsel %vm198, %v199, %v200
  %v202 = vrot.slane %v72, 7
  %v203 = vsel %vm198, %v200, %v202
  %v204 = vsel %vm198, %v202, %v193
  %v209 = vsel %vm198, %v193, %v199
  %v210 = vsel %vm188, 0.0, %v209
  %v211 = vsel %vm189, 0.0, %v201
  %v212 = vsel %vm190, 0.0, %v203
  %v213 = vsel %vm191, 0.0, %v204
  %v214 = vadd.f32 %v95, %v210
  %v215 = vadd.f32 %v98, %v211
  %v216 = vadd.f32 %v101, %v212
  %v217 = vadd.f32 %v104, %v213
  %vm218 = vcmp.eq.s32.totalorder %v184, 15
  %vm219 = vcmp.eq.s32.totalorder %v185, 15
  %vm220 = vcmp.eq.s32.totalorder %v186, 15
  %vm221 = vcmp.eq.s32.totalorder %v187, 15
  %vm226 = vcmask 1046528
  %v227 = vrot.slane %v124, 1
  %v228 = vrot.slane %v127, 1
  %v229 = vsel %vm226, %v227, %v228
  %v230 = vrot.slane %v130, 1
  %v231 = vsel %vm226, %v228, %v230
  %v232 = vrot.slane %v133, 1
  %v233 = vsel %vm226, %v230, %v232
  %v239 = vsel %vm226, %v232, %v227
  %v240 = vsel %vm218, 0.0, %v229
  %v241 = vsel %vm219, 0.0, %v231
  %v242 = vsel %vm220, 0.0, %v233
  %v243 = vsel %vm221, 0.0, %v239
  %v244 = vadd.f32 %v214, %v240
  %v245 = vadd.f32 %v215, %v241
  %v246 = vadd.f32 %v216, %v242
  %v247 = vadd.f32 %v217, %v243
  %v252 = vrot.slane %v244, 1
  %v253 = vrot.slane %v245, 1
  %v254 = vsel %vm226, %v252, %v253
  %v255 = vrot.slane %v246, 1
  %v256 = vsel %vm226, %v253, %v255
  %v257 = vrot.slane %v247, 1
  %v258 = vsel %vm226, %v255, %v257
  %v264 = vsel %vm226, %v257, %v252
  %v265 = vmax.f32 %v244, %v254
  %v266 = vmax.f32 %v245, %v256
  %v267 = vmax.f32 %v246, %v258
  %v268 = vmax.f32 %v247, %v264
  %269 = vst [vmem:[#allocation2] sm:$0xff] %v265
  %270 = vst [vmem:[#allocation2 + $0x8] sm:$0xff] %v266
  %271 = vst [vmem:[#allocation2 + $0x10] sm:$0xff] %v267
  %272 = vst [vmem:[#allocation2 + $0x18] sm:$0xff] %v268
  %v273 = vld [vmem:[#allocation2] ss:$2 sm:$0xff]
  %s274 = scalar_lea.vmem [#allocation2], 16
  %v275 = vld [vmem:[%s274] ss:$2 sm:$0xff]
  %v276 = vld [vmem:[%s2] sm:$0x1]
  %v278 = vperm.slane %v276, 0
  %v280 = vadd.f32 %v273, %v278
  %v281 = vadd.f32 %v275, %v278
  %v282 = vmax.f32 %v280, 0.0
  %v283 = vmax.f32 %v281, 0.0
  %284 = vst [vmem:[%s3] sm:$0xff] %v282
  %285 = vst [vmem:[%s3 + $0x8] sm:$0xff] %v283
  // Predicated region
  $region14: #{cnn1d_forward.4} parent=0 // pred_check
    _
  $region15: #{cnn1d_forward.4} parent=0 // pred_check_branch
    %287 = sbr.rel (0) target = $region17
  $region16: #{cnn1d_forward.4} parent=0 // pred_region
    _
  $region17: #{cnn1d_forward.4} parent=0 // pred_fallthru
    _
  // Predicated region
  $region18: #{cnn1d_forward.4} parent=0 // pred_check
    _
  $region19: #{cnn1d_forward.4} parent=0 // pred_check_branch
    %289 = sbr.rel (0) target = $region21
  $region20: #{cnn1d_forward.4} parent=0 // pred_region
    _
  $region21: #{cnn1d_forward.4} parent=0 // pred_fallthru
    _

// kernel: cnn1d_forward.7
$region0: #{cnn1d_forward.7}
  #allocation0 [shape = 'u32[]', space=smem, size = 0x4, offset = 0x4, fixed_abs, tag = 'smem constant byte address 0x4 - core index']
  #allocation1 [shape = 'u32[72,128]{1,0:T(1,128)}', space=vmem, size = 0x9000, scoped, tag = 'internal scratch']
  #allocation2 [shape = 'f32[2,128]{1,0:T(2,128)}', space=vmem, size = 0x400, scoped, tag = 'scratch operand']
  %s0 = inlined_call_operand.vmem [shape: f32[2,512], index: 0, kind: input, shape index: {}]
  %s1 = inlined_call_operand.hbm [shape: f32[512,128], index: 1, kind: input, shape index: {}]
  %s2 = inlined_call_operand.vmem [shape: f32[1,128], index: 2, kind: input, shape index: {}]
  %s3 = inlined_call_operand.hbm [shape: f32[128,128], index: 3, kind: input, shape index: {}]
  %s4 = inlined_call_operand.vmem [shape: f32[1,128], index: 4, kind: input, shape index: {}]
  %s5 = inlined_call_operand.hbm [shape: f32[2,128], index: 5, kind: output, shape index: {}]
  %s6 = sld [smem:[#allocation0]]
  $region46: #{cnn1d_forward.7} parent=0
    _
  %s8 = ssub.s32 1, %s6
  %s9 = scalar_select 0, %s8, %s6
  $region1: #{cnn1d_forward.7} parent=0
    #allocation3 [shape = 'u8[262144]{0}', space=vmem, size = 0x40000, scoped, tag = 'input window, operand 1, single buffered']
    #allocation4 [shape = 's32[1]{0}', space=sflag, size = 0x4, scoped, tag = 'scoped memory for cnn1d_forward.7']
    #allocation5 [shape = 's32[1]{0}', space=sflag, size = 0x4, scoped, tag = 'scoped memory for cnn1d_forward.7']
    #allocation6 [shape = 'u8[65536]{0}', space=vmem, size = 0x10000, scoped, tag = 'input window, operand 3, single buffered']
    #allocation7 [shape = 's32[1]{0}', space=sflag, size = 0x4, scoped, tag = 'scoped memory for cnn1d_forward.7']
    #allocation8 [shape = 'u8[1024]{0}', space=vmem, size = 0x400, scoped, tag = 'output window, operand 0, single buffered']
    %10 = vsyncpa [#allocation4], 0
    %11 = vsyncpa [#allocation7], 0
    %12 = vsyncpa [#allocation5], 0
    // Predicated region
    $region2: #{cnn1d_forward.7} parent=1 // pred_check
      _
    $region3: #{cnn1d_forward.7} parent=1 // pred_check_branch
      %14 = sbr.rel (0) target = $region5
    $region4: #{cnn1d_forward.7} parent=1 // pred_region
      _
    $region5: #{cnn1d_forward.7} parent=1 // pred_fallthru
      _
    // Predicated region
    $region6: #{cnn1d_forward.7} parent=1 // pred_check
      _
    $region7: #{cnn1d_forward.7} parent=1 // pred_check_branch
      %16 = sbr.rel (0) target = $region9
    $region8: #{cnn1d_forward.7} parent=1 // pred_region
      %18 = vsyncadd [#allocation4], 0
      %s19 = sshll.u32 %s1, 4
      %s20 = int_to_ptr.hbm [resolvable:$true] %s19
      %s21 = sshll.u32 [#allocation3], 4
      %s22 = int_to_ptr.vmem [resolvable:$true] %s21
      %27 = dma.hbm_to_vmem [thread:$0]  %s20, 8192, %s22, [#allocation4], 128, 128, 8
    $region9: #{cnn1d_forward.7} parent=1 // pred_fallthru
      _
    // Predicated region
    $region10: #{cnn1d_forward.7} parent=1 // pred_check
      _
    $region11: #{cnn1d_forward.7} parent=1 // pred_check_branch
      %29 = sbr.rel (0) target = $region13
    $region12: #{cnn1d_forward.7} parent=1 // pred_region
      _
    $region13: #{cnn1d_forward.7} parent=1 // pred_fallthru
      _
    // Predicated region
    $region14: #{cnn1d_forward.7} parent=1 // pred_check
      _
    $region15: #{cnn1d_forward.7} parent=1 // pred_check_branch
      %31 = sbr.rel (0) target = $region17
    $region16: #{cnn1d_forward.7} parent=1 // pred_region
      %33 = vsyncadd [#allocation7], 0
      %s34 = sshll.u32 %s3, 4
      %s35 = int_to_ptr.hbm [resolvable:$true] %s34
      %s36 = sshll.u32 [#allocation6], 4
      %s37 = int_to_ptr.vmem [resolvable:$true] %s36
      %42 = dma.hbm_to_vmem [thread:$0]  %s35, 2048, %s37, [#allocation7], 128, 128, 8
    $region17: #{cnn1d_forward.7} parent=1 // pred_fallthru
      _
    // Predicated region
    $region18: #{cnn1d_forward.7} parent=1 // pred_check
      _
    $region19: #{cnn1d_forward.7} parent=1 // pred_check_branch
      %44 = sbr.rel (0) target = $region21
    $region20: #{cnn1d_forward.7} parent=1 // pred_region
      _
    $region21: #{cnn1d_forward.7} parent=1 // pred_fallthru
      _
    // Predicated region
    $region22: #{cnn1d_forward.7} parent=1 // pred_check
      _
    $region23: #{cnn1d_forward.7} parent=1 // pred_check_branch
      %46 = sbr.rel (0) target = $region25
    $region24: #{cnn1d_forward.7} parent=1 // pred_region
      %48 = dma.done [#allocation4], 8192
    $region25: #{cnn1d_forward.7} parent=1 // pred_fallthru
      _
    // Predicated region
    $region26: #{cnn1d_forward.7} parent=1 // pred_check
      _
    $region27: #{cnn1d_forward.7} parent=1 // pred_check_branch
      %50 = sbr.rel (0) target = $region29
    $region28: #{cnn1d_forward.7} parent=1 // pred_region
      %52 = dma.done [#allocation7], 2048
    $region29: #{cnn1d_forward.7} parent=1 // pred_fallthru
      _
    %p53 = scmp.eq.s32.totalorder 0, 0
    // Predicated region
    $region30: #{cnn1d_forward.7} parent=1 // pred_check
      %p54 = pneg %p53
    $region31: #{cnn1d_forward.7} parent=1 // pred_check_branch
      %56 = sbr.rel (%p54) target = $region33
    $region32: #{cnn1d_forward.7} parent=1 // pred_region
      %57 = vst [vmem:[#allocation2] sm:$0x3] 0.0
    $region33: #{cnn1d_forward.7} parent=1 // pred_fallthru
      _
    %v58 = vld [vmem:[#allocation2] sm:$0x3]
    %v59 = vld [vmem:[%s0] sm:$0xff]
    %v60 = vld [vmem:[#allocation3] sm:$0xff]
    %v61 = vld [vmem:[#allocation3 + $0x8] sm:$0xff]
    %v62 = vld [vmem:[#allocation3 + $0x10] sm:$0xff]
    %v63 = vld [vmem:[#allocation3 + $0x18] sm:$0xff]
    %v64 = vld [vmem:[#allocation3 + $0x20] sm:$0xff]
    %v65 = vld [vmem:[#allocation3 + $0x28] sm:$0xff]
    %v66 = vld [vmem:[#allocation3 + $0x30] sm:$0xff]
    %v67 = vld [vmem:[#allocation3 + $0x38] sm:$0xff]
    %v68 = vld [vmem:[#allocation3 + $0x40] sm:$0xff]
    %v69 = vld [vmem:[#allocation3 + $0x48] sm:$0xff]
    %v70 = vld [vmem:[#allocation3 + $0x50] sm:$0xff]
    %v71 = vld [vmem:[#allocation3 + $0x58] sm:$0xff]
    %v72 = vld [vmem:[#allocation3 + $0x60] sm:$0xff]
    %v73 = vld [vmem:[#allocation3 + $0x68] sm:$0xff]
    %v74 = vld [vmem:[#allocation3 + $0x70] sm:$0xff]
    %v75 = vld [vmem:[#allocation3 + $0x78] sm:$0xff]
    %v76 = vld [vmem:[#allocation3 + $0x80] sm:$0xff]
    %v77 = vld [vmem:[#allocation3 + $0x88] sm:$0xff]
    %v78 = vld [vmem:[#allocation3 + $0x90] sm:$0xff]
    %v79 = vld [vmem:[#allocation3 + $0x98] sm:$0xff]
    %v80 = vld [vmem:[#allocation3 + $0xa0] sm:$0xff]
    %v81 = vld [vmem:[#allocation3 + $0xa8] sm:$0xff]
    %v82 = vld [vmem:[#allocation3 + $0xb0] sm:$0xff]
    %v83 = vld [vmem:[#allocation3 + $0xb8] sm:$0xff]
    %v84 = vld [vmem:[#allocation3 + $0xc0] sm:$0xff]
    %v85 = vld [vmem:[#allocation3 + $0xc8] sm:$0xff]
    %v86 = vld [vmem:[#allocation3 + $0xd0] sm:$0xff]
    %v87 = vld [vmem:[#allocation3 + $0xd8] sm:$0xff]
    %v88 = vld [vmem:[#allocation3 + $0xe0] sm:$0xff]
    %v89 = vld [vmem:[#allocation3 + $0xe8] sm:$0xff]
    %v90 = vld [vmem:[#allocation3 + $0xf0] sm:$0xff]
    %v91 = vld [vmem:[#allocation3 + $0xf8] sm:$0xff]
    %v92 = vld [vmem:[#allocation3 + $0x100] sm:$0xff]
    %v93 = vld [vmem:[#allocation3 + $0x108] sm:$0xff]
    %v94 = vld [vmem:[#allocation3 + $0x110] sm:$0xff]
    %v95 = vld [vmem:[#allocation3 + $0x118] sm:$0xff]
    %v96 = vld [vmem:[#allocation3 + $0x120] sm:$0xff]
    %v97 = vld [vmem:[#allocation3 + $0x128] sm:$0xff]
    %v98 = vld [vmem:[#allocation3 + $0x130] sm:$0xff]
    %v99 = vld [vmem:[#allocation3 + $0x138] sm:$0xff]
    %v100 = vld [vmem:[#allocation3 + $0x140] sm:$0xff]
    %v101 = vld [vmem:[#allocation3 + $0x148] sm:$0xff]
    %v102 = vld [vmem:[#allocation3 + $0x150] sm:$0xff]
    %v103 = vld [vmem:[#allocation3 + $0x158] sm:$0xff]
    %v104 = vld [vmem:[#allocation3 + $0x160] sm:$0xff]
    %v105 = vld [vmem:[#allocation3 + $0x168] sm:$0xff]
    %v106 = vld [vmem:[#allocation3 + $0x170] sm:$0xff]
    %v107 = vld [vmem:[#allocation3 + $0x178] sm:$0xff]
    %v108 = vld [vmem:[#allocation3 + $0x180] sm:$0xff]
    %v109 = vld [vmem:[#allocation3 + $0x188] sm:$0xff]
    %v110 = vld [vmem:[#allocation3 + $0x190] sm:$0xff]
    %v111 = vld [vmem:[#allocation3 + $0x198] sm:$0xff]
    %v112 = vld [vmem:[#allocation3 + $0x1a0] sm:$0xff]
    %v113 = vld [vmem:[#allocation3 + $0x1a8] sm:$0xff]
    %v114 = vld [vmem:[#allocation3 + $0x1b0] sm:$0xff]
    %v115 = vld [vmem:[#allocation3 + $0x1b8] sm:$0xff]
    %v116 = vld [vmem:[#allocation3 + $0x1c0] sm:$0xff]
    %v117 = vld [vmem:[#allocation3 + $0x1c8] sm:$0xff]
    %v118 = vld [vmem:[#allocation3 + $0x1d0] sm:$0xff]
    %v119 = vld [vmem:[#allocation3 + $0x1d8] sm:$0xff]
    %v120 = vld [vmem:[#allocation3 + $0x1e0] sm:$0xff]
    %v121 = vld [vmem:[#allocation3 + $0x1e8] sm:$0xff]
    %v122 = vld [vmem:[#allocation3 + $0x1f0] sm:$0xff]
    %v123 = vld [vmem:[#allocation3 + $0x1f8] sm:$0xff]
    %125 = vst [vmem:[#allocation1] ss:$4 sm:$0xff] %v59
    %v126 = vld.sshfl [vmem:[#allocation1] sm:$0xff pattern:$0x73625140]
    %v127 = vld.sshfl [vmem:[#allocation1 + $0x8] sm:$0xff pattern:$0x73625140]
    %v128 = vld.sshfl [vmem:[#allocation1 + $0x10] sm:$0xff pattern:$0x73625140]
    %v129 = vld.sshfl [vmem:[#allocation1 + $0x18] sm:$0xff pattern:$0x73625140]
    %134 = vmatpush.msra.mxu0 %v75
    %135 = vmatpush.msra.mxu0 %v74
    %136 = vmatpush.msra.mxu0 %v73
    %137 = vmatpush.msra.mxu0 %v72
    %138 = vmatpush.msra.mxu0 %v71
    %139 = vmatpush.msra.mxu0 %v70
    %140 = vmatpush.msra.mxu0 %v69
    %141 = vmatpush.msra.mxu0 %v68
    %142 = vmatpush.msra.mxu0 %v67
    %143 = vmatpush.msra.mxu0 %v66
    %144 = vmatpush.msra.mxu0 %v65
    %145 = vmatpush.msra.mxu0 %v64
    %146 = vmatpush.msra.mxu0 %v63
    %147 = vmatpush.msra.mxu0 %v62
    %148 = vmatpush.msra.mxu0 %v61
    %149 = vmatpush.msra.mxu0 %v60
    %150 = vmatmul.f32.gmra.mxu0 %v126
    %v151 = vpop.f32.mrf.mxu0
    %v152 = vadd.f32 0.0, %v151
    %153 = vdwg.mxu0
    %154 = vmatpush.msra.mxu0 %v91
    %155 = vmatpush.msra.mxu0 %v90
    %156 = vmatpush.msra.mxu0 %v89
    %157 = vmatpush.msra.mxu0 %v88
    %158 = vmatpush.msra.mxu0 %v87
    %159 = vmatpush.msra.mxu0 %v86
    %160 = vmatpush.msra.mxu0 %v85
    %161 = vmatpush.msra.mxu0 %v84
    %162 = vmatpush.msra.mxu0 %v83
    %163 = vmatpush.msra.mxu0 %v82
    %164 = vmatpush.msra.mxu0 %v81
    %165 = vmatpush.msra.mxu0 %v80
    %166 = vmatpush.msra.mxu0 %v79
    %167 = vmatpush.msra.mxu0 %v78
    %168 = vmatpush.msra.mxu0 %v77
    %169 = vmatpush.msra.mxu0 %v76
    %170 = vmatmul.f32.gmra.mxu0 %v127
    %v171 = vpop.f32.mrf.mxu0
    %v172 = vadd.f32 %v152, %v171
    %173 = vdwg.mxu0
    %174 = vmatpush.msra.mxu0 %v107
    %175 = vmatpush.msra.mxu0 %v106
    %176 = vmatpush.msra.mxu0 %v105
    %177 = vmatpush.msra.mxu0 %v104
    %178 = vmatpush.msra.mxu0 %v103
    %179 = vmatpush.msra.mxu0 %v102
    %180 = vmatpush.msra.mxu0 %v101
    %181 = vmatpush.msra.mxu0 %v100
    %182 = vmatpush.msra.mxu0 %v99
    %183 = vmatpush.msra.mxu0 %v98
    %184 = vmatpush.msra.mxu0 %v97
    %185 = vmatpush.msra.mxu0 %v96
    %186 = vmatpush.msra.mxu0 %v95
    %187 = vmatpush.msra.mxu0 %v94
    %188 = vmatpush.msra.mxu0 %v93
    %189 = vmatpush.msra.mxu0 %v92
    %190 = vmatmul.f32.gmra.mxu0 %v128
    %v191 = vpop.f32.mrf.mxu0
    %v192 = vadd.f32 %v172, %v191
    %193 = vdwg.mxu0
    %194 = vmatpush.msra.mxu0 %v123
    %195 = vmatpush.msra.mxu0 %v122
    %196 = vmatpush.msra.mxu0 %v121
    %197 = vmatpush.msra.mxu0 %v120
    %198 = vmatpush.msra.mxu0 %v119
    %199 = vmatpush.msra.mxu0 %v118
    %200 = vmatpush.msra.mxu0 %v117
    %201 = vmatpush.msra.mxu0 %v116
    %202 = vmatpush.msra.mxu0 %v115
    %203 = vmatpush.msra.mxu0 %v114
    %204 = vmatpush.msra.mxu0 %v113
    %205 = vmatpush.msra.mxu0 %v112
    %206 = vmatpush.msra.mxu0 %v111
    %207 = vmatpush.msra.mxu0 %v110
    %208 = vmatpush.msra.mxu0 %v109
    %209 = vmatpush.msra.mxu0 %v108
    %210 = vmatmul.f32.gmra.mxu0 %v129
    %v211 = vpop.f32.mrf.mxu0
    %v212 = vadd.f32 %v192, %v211
    %213 = vdwg.mxu0
    %v214 = vadd.f32 %v58, %v212
    %215 = vst [vmem:[#allocation2] sm:$0x3] %v214
    // Predicated region
    $region34: #{cnn1d_forward.7} parent=1 // pred_check
      %p216 = pneg %p53
    $region35: #{cnn1d_forward.7} parent=1 // pred_check_branch
      %218 = sbr.rel (%p216) target = $region37
    $region36: #{cnn1d_forward.7} parent=1 // pred_region
      %v219 = vld [vmem:[#allocation2] sm:$0x3]
      %v220 = vld [vmem:[%s2] sm:$0x1]
      %v222 = vperm.slane %v220, 0
      %v224 = vadd.f32 %v219, %v222
      %v225 = vmax.f32 %v224, 0.0
      %v226 = vld [vmem:[#allocation6] sm:$0xff]
      %v227 = vld [vmem:[#allocation6 + $0x8] sm:$0xff]
      %v228 = vld [vmem:[#allocation6 + $0x10] sm:$0xff]
      %v229 = vld [vmem:[#allocation6 + $0x18] sm:$0xff]
      %v230 = vld [vmem:[#allocation6 + $0x20] sm:$0xff]
      %v231 = vld [vmem:[#allocation6 + $0x28] sm:$0xff]
      %v232 = vld [vmem:[#allocation6 + $0x30] sm:$0xff]
      %v233 = vld [vmem:[#allocation6 + $0x38] sm:$0xff]
      %v234 = vld [vmem:[#allocation6 + $0x40] sm:$0xff]
      %v235 = vld [vmem:[#allocation6 + $0x48] sm:$0xff]
      %v236 = vld [vmem:[#allocation6 + $0x50] sm:$0xff]
      %v237 = vld [vmem:[#allocation6 + $0x58] sm:$0xff]
      %v238 = vld [vmem:[#allocation6 + $0x60] sm:$0xff]
      %v239 = vld [vmem:[#allocation6 + $0x68] sm:$0xff]
      %v240 = vld [vmem:[#allocation6 + $0x70] sm:$0xff]
      %v241 = vld [vmem:[#allocation6 + $0x78] sm:$0xff]
      %v242 = vld [vmem:[%s4] sm:$0x1]
      %v244 = vperm.slane %v242, 0
      %246 = vmatpush.msra.mxu0 %v241
      %247 = vmatpush.msra.mxu0 %v240
      %248 = vmatpush.msra.mxu0 %v239
      %249 = vmatpush.msra.mxu0 %v238
      %250 = vmatpush.msra.mxu0 %v237
      %251 = vmatpush.msra.mxu0 %v236
      %252 = vmatpush.msra.mxu0 %v235
      %253 = vmatpush.msra.mxu0 %v234
      %254 = vmatpush.msra.mxu0 %v233
      %255 = vmatpush.msra.mxu0 %v232
      %256 = vmatpush.msra.mxu0 %v231
      %257 = vmatpush.msra.mxu0 %v230
      %258 = vmatpush.msra.mxu0 %v229
      %259 = vmatpush.msra.mxu0 %v228
      %260 = vmatpush.msra.mxu0 %v227
      %261 = vmatpush.msra.mxu0 %v226
      %262 = vmatmul.f32.gmra.mxu0 %v225
      %v263 = vpop.f32.mrf.mxu0
      %v264 = vadd.f32 %v244, %v263
      %265 = vdwg.mxu0
      %266 = vst [vmem:[#allocation8] sm:$0x3] %v264
    $region37: #{cnn1d_forward.7} parent=1 // pred_fallthru
      _
    // Predicated region
    $region38: #{cnn1d_forward.7} parent=1 // pred_check
      _
    $region39: #{cnn1d_forward.7} parent=1 // pred_check_branch
      %268 = sbr.rel (0) target = $region41
    $region40: #{cnn1d_forward.7} parent=1 // pred_region
      %270 = vsyncadd [#allocation5], 0
      %s272 = sshll.u32 [#allocation8], 4
      %s273 = int_to_ptr.vmem [resolvable:$true] %s272
      %s274 = sshll.u32 %s5, 4
      %s275 = int_to_ptr.hbm [resolvable:$true] %s274
      %277 = dma.vmem_to_hbm [thread:$0]  %s273, 32, %s275, [#allocation5]
    $region41: #{cnn1d_forward.7} parent=1 // pred_fallthru
      _
    // Predicated region
    $region42: #{cnn1d_forward.7} parent=1 // pred_check
      _
    $region43: #{cnn1d_forward.7} parent=1 // pred_check_branch
      %279 = sbr.rel (0) target = $region45
    $region44: #{cnn1d_forward.7} parent=1 // pred_region
      %281 = dma.done [#allocation5], 32
    $region45: #{cnn1d_forward.7} parent=1 // pred_fallthru
      _
    %282 = vsyncpa [#allocation4], 1
    %283 = vsyncpa [#allocation7], 1
    %284 = vsyncpa [#allocation5], 1

</llo_original>
